<compile_context>
chip_gen: v7x
topology: tpu7x:2x2x1
jax: 0.10.0
libtpu: 0.0.40
codegen_flags: <defaults>
</compile_context>

<pallas_src>
import jax
import jax.numpy as jnp
from jax.experimental import pallas as pl
from jax.experimental.pallas import tpu as pltpu


def _l2_normalize(x, axis):
    # matches torch.nn.functional.normalize: x / max(||x||_2, 1e-12)
    n = jnp.sqrt(jnp.sum(x * x, axis=axis, keepdims=True))
    return x / jnp.maximum(n, 1e-12)


def classifier_kernel(u1_ref, u2_ref, img_ref, out_ref):
    Bt, F, R = img_ref.shape          # Bt images, F channels (sublanes), R=H*W (lanes)

    u1 = u1_ref[...]                  # (I, F) resident weights
    u2 = u2_ref[...]                  # (I, F)

    # Small unrolled loop over the images of this tile; iterations are independent.
    for b in range(Bt):
        x = img_ref[b]                                        # (F, R)

        # per-pixel L2 normalize over channels (sublane reduce over F)
        ssq = jnp.sum(x * x, axis=0, keepdims=True)           # (1, R)
        av = x * jax.lax.rsqrt(jnp.maximum(ssq, 1e-24))       # == x / max(||x||, 1e-12)

        # a[i,r] = sum_f U1[i,f] av[f,r] ; g likewise with U2  (canonical MXU matmuls)
        a = jnp.dot(u1, av, preferred_element_type=jnp.float32)   # (I, R)
        g = jnp.dot(u2, av, preferred_element_type=jnp.float32)   # (I, R)

        # softmax over r folded into the final reduction (all lane-dim reduces)
        p = jnp.exp(a - jnp.max(a, axis=-1, keepdims=True))       # (I, R)
        num = jnp.sum(p * g, axis=-1, keepdims=True)              # (I, 1)
        den = jnp.sum(p, axis=-1, keepdims=True)                  # (I, 1)
        res = num * pl.reciprocal(den, approx=True)               # (I, 1)

        out_ref[0, b, :] = res[:, 0]                              # Pred_att row


def classifier_forward(V, W1, W2, img, *, block_b=4):
    B, F, H, W = img.shape
    R = H * W
    I = V.shape[0]

    # ---- batch-invariant precompute, hoisted out of the kernel ----
    vv = _l2_normalize(V.astype(jnp.float32), axis=1)        # (I, dim_v)
    U1 = jnp.dot(vv, W1.astype(jnp.float32))                 # (I, F)
    U2 = jnp.dot(vv, W2.astype(jnp.float32))                 # (I, F)

    # ---- native layout: (B, F, H, W) -> (B, F, R); contiguous merge, no transpose ----
    x = img.reshape(B, F, R).astype(jnp.float32)

    # ---- batch tiling: Bt images per grid step (pad B if needed; padded rows are
    #      all-zero -> eps clamp keeps them NaN-free, and they are sliced off) ----
    Bt = min(B, block_b)
    nb = pl.cdiv(B, Bt)
    B_pad = nb * Bt
    if B_pad != B:
        x = jnp.pad(x, ((0, B_pad - B), (0, 0), (0, 0)))

    out = pl.pallas_call(
        classifier_kernel,
        out_shape=jax.ShapeDtypeStruct((nb, Bt, I), jnp.float32),
        grid_spec=pltpu.PrefetchScalarGridSpec(
            num_scalar_prefetch=0,
            grid=(nb,),
            in_specs=[
                pl.BlockSpec((I, F), lambda g: (0, 0)),         # U1 (resident)
                pl.BlockSpec((I, F), lambda g: (0, 0)),         # U2 (resident)
                pl.BlockSpec((Bt, F, R), lambda g: (g, 0, 0)),  # image tile, native layout
            ],
            out_specs=pl.BlockSpec((1, Bt, I), lambda g: (g, 0, 0)),
        ),
        compiler_params=pltpu.CompilerParams(
            # No carried state -> batch axis can shard across v7x's 2 TCs.
            dimension_semantics=("parallel",)),
    )(U1, U2, x)
    return out.reshape(B_pad, I)[:B]


if __name__ == "__main__":
    key = jax.random.PRNGKey(0)
    k1, k2, k3, k4 = jax.random.split(key, 4)

    # Small shapes consistent with the module: 's' model -> dim_f = 768, dim_v = 300.
    B, H, Wd = 2, 4, 4
    num_att, dim_v, dim_f = 16, 300, 768

    w2v_att = jax.random.normal(k1, (num_att, dim_v), jnp.float32)
    # use_w2v=True branch: V initialized to F.normalize(w2v_att)
    V = _l2_normalize(w2v_att, axis=1)
    W1 = jax.random.normal(k2, (dim_v, dim_f), jnp.float32)  # nn.init.normal_
    W2 = jax.random.normal(k3, (dim_v, dim_f), jnp.float32)  # nn.init.normal_
    img = jax.random.normal(k4, (B, dim_f, H, Wd), jnp.float32)

    out = jax.block_until_ready(classifier_forward(V, W1, W2, img))

    # Pure-JAX reference for a correctness sanity check.
    vv = _l2_normalize(V, axis=1)
    av = _l2_normalize(img.reshape(B, dim_f, H * Wd), axis=1)
    A = jnp.einsum('iv,vf,bfr->bir', vv, W1, av)
    A = jax.nn.softmax(A, axis=-1)
    Fp = jnp.einsum('bir,bfr->bif', A, av)
    ref = jnp.einsum('iv,vf,bif->bi', vv, W2, Fp)

    assert out.shape == (B, num_att)
    assert jnp.allclose(out, ref, atol=2e-3, rtol=2e-3), float(jnp.max(jnp.abs(out - ref)))
    print("KERNEL_OK")
</pallas_src>

<mosaic_0001>
module attributes {stable_mosaic.version = 11 : i64} {
  func.func @classifier_kernel(%arg0: i32, %arg1: memref<16x768xf32, #tpu.memory_space<vmem>>, %arg2: memref<16x768xf32, #tpu.memory_space<vmem>>, %arg3: memref<2x768x16xf32, #tpu.memory_space<vmem>>, %arg4: memref<1x2x16xf32, #tpu.memory_space<vmem>>) attributes {dimension_semantics = [#tpu.dimension_semantics<parallel>], iteration_bounds = array<i64: 1>, scalar_prefetch = 0 : i64, scratch_operands = 0 : i64, tpu.core_type = #tpu.core_type<tc>, window_params = [{pipeline_mode = #tpu.pipeline_mode<synchronous>, transform_indices = @transform_0, window_bounds = array<i64: 16, 768>}, {pipeline_mode = #tpu.pipeline_mode<synchronous>, transform_indices = @transform_1, window_bounds = array<i64: 16, 768>}, {transform_indices = @transform_2, window_bounds = array<i64: 2, 768, 16>}, {transform_indices = @transform_3, window_bounds = array<i64: 1, 2, 16>}]} {
    %c0 = arith.constant 0 : index
    %c0_0 = arith.constant 0 : index
    %0 = vector.load %arg1[%c0, %c0_0] : memref<16x768xf32, #tpu.memory_space<vmem>>, vector<16x768xf32>
    %c0_1 = arith.constant 0 : index
    %c0_2 = arith.constant 0 : index
    %1 = vector.load %arg2[%c0_1, %c0_2] : memref<16x768xf32, #tpu.memory_space<vmem>>, vector<16x768xf32>
    %c0_3 = arith.constant 0 : index
    %c0_4 = arith.constant 0 : index
    %c0_5 = arith.constant 0 : index
    %2 = vector.load %arg3[%c0_3, %c0_4, %c0_5] : memref<2x768x16xf32, #tpu.memory_space<vmem>>, vector<1x768x16xf32>
    %3 = vector.shape_cast %2 : vector<1x768x16xf32> to vector<768x16xf32>
    %4 = arith.mulf %3, %3 : vector<768x16xf32>
    %cst = arith.constant dense<0.000000e+00> : vector<16xf32>
    %5 = vector.multi_reduction <add>, %4, %cst [0] : vector<768x16xf32> to vector<16xf32>
    %6 = vector.shape_cast %5 : vector<16xf32> to vector<1x16xf32>
    %cst_6 = arith.constant 1.000000e-24 : f32
    %7 = vector.broadcast %cst_6 : f32 to vector<1x16xf32>
    %8 = arith.maximumf %6, %7 : vector<1x16xf32>
    %9 = math.rsqrt %8 : vector<1x16xf32>
    %10 = vector.broadcast %9 : vector<1x16xf32> to vector<768x16xf32>
    %11 = arith.mulf %3, %10 : vector<768x16xf32>
    %cst_7 = arith.constant dense<0.000000e+00> : vector<16x16xf32>
    %12 = tpu.matmul %0, %11, %cst_7 {dimension_numbers = #tpu.dot_dimension_numbers<[1], [0], [0], [1], [0, 0, 1, 1], [], []>} : vector<16x768xf32>, vector<768x16xf32>, vector<16x16xf32> -> vector<16x16xf32>
    %cst_8 = arith.constant dense<0.000000e+00> : vector<16x16xf32>
    %13 = tpu.matmul %1, %11, %cst_8 {dimension_numbers = #tpu.dot_dimension_numbers<[1], [0], [0], [1], [0, 0, 1, 1], [], []>} : vector<16x768xf32>, vector<768x16xf32>, vector<16x16xf32> -> vector<16x16xf32>
    %cst_9 = arith.constant dense<0xFF800000> : vector<16xf32>
    %14 = vector.multi_reduction <maximumf>, %12, %cst_9 [1] : vector<16x16xf32> to vector<16xf32>
    %15 = vector.shape_cast %14 : vector<16xf32> to vector<16x1xf32>
    %16 = vector.broadcast %15 : vector<16x1xf32> to vector<16x16xf32>
    %17 = arith.subf %12, %16 : vector<16x16xf32>
    %18 = math.exp %17 : vector<16x16xf32>
    %19 = arith.mulf %18, %13 : vector<16x16xf32>
    %cst_10 = arith.constant dense<0.000000e+00> : vector<16xf32>
    %20 = vector.multi_reduction <add>, %19, %cst_10 [1] : vector<16x16xf32> to vector<16xf32>
    %21 = vector.shape_cast %20 : vector<16xf32> to vector<16x1xf32>
    %cst_11 = arith.constant dense<0.000000e+00> : vector<16xf32>
    %22 = vector.multi_reduction <add>, %18, %cst_11 [1] : vector<16x16xf32> to vector<16xf32>
    %23 = vector.shape_cast %22 : vector<16xf32> to vector<16x1xf32>
    %24 = tpu.reciprocal %23 {approx = true} : vector<16x1xf32> -> vector<16x1xf32>
    %25 = arith.mulf %21, %24 : vector<16x1xf32>
    %26 = vector.shape_cast %25 : vector<16x1xf32> to vector<16xf32>
    %c0_12 = arith.constant 0 : index
    %c0_13 = arith.constant 0 : index
    %c0_14 = arith.constant 0 : index
    %27 = vector.load %arg4[%c0_12, %c0_13, %c0_14] : memref<1x2x16xf32, #tpu.memory_space<vmem>>, vector<1x1x16xf32>
    %28 = vector.shape_cast %27 : vector<1x1x16xf32> to vector<16xf32>
    %29 = vector.shape_cast %26 : vector<16xf32> to vector<1x1x16xf32>
    tpu.vector_store %arg4[%c0_12, %c0_13, %c0_14], %29 {strides = array<i32>} : memref<1x2x16xf32, #tpu.memory_space<vmem>>, vector<1x1x16xf32>,
    %c1 = arith.constant 1 : index
    %c0_15 = arith.constant 0 : index
    %c0_16 = arith.constant 0 : index
    %30 = vector.load %arg3[%c1, %c0_15, %c0_16] : memref<2x768x16xf32, #tpu.memory_space<vmem>>, vector<1x768x16xf32>
    %31 = vector.shape_cast %30 : vector<1x768x16xf32> to vector<768x16xf32>
    %32 = arith.mulf %31, %31 : vector<768x16xf32>
    %cst_17 = arith.constant dense<0.000000e+00> : vector<16xf32>
    %33 = vector.multi_reduction <add>, %32, %cst_17 [0] : vector<768x16xf32> to vector<16xf32>
    %34 = vector.shape_cast %33 : vector<16xf32> to vector<1x16xf32>
    %cst_18 = arith.constant 1.000000e-24 : f32
    %35 = vector.broadcast %cst_18 : f32 to vector<1x16xf32>
    %36 = arith.maximumf %34, %35 : vector<1x16xf32>
    %37 = math.rsqrt %36 : vector<1x16xf32>
    %38 = vector.broadcast %37 : vector<1x16xf32> to vector<768x16xf32>
    %39 = arith.mulf %31, %38 : vector<768x16xf32>
    %cst_19 = arith.constant dense<0.000000e+00> : vector<16x16xf32>
    %40 = tpu.matmul %0, %39, %cst_19 {dimension_numbers = #tpu.dot_dimension_numbers<[1], [0], [0], [1], [0, 0, 1, 1], [], []>} : vector<16x768xf32>, vector<768x16xf32>, vector<16x16xf32> -> vector<16x16xf32>
    %cst_20 = arith.constant dense<0.000000e+00> : vector<16x16xf32>
    %41 = tpu.matmul %1, %39, %cst_20 {dimension_numbers = #tpu.dot_dimension_numbers<[1], [0], [0], [1], [0, 0, 1, 1], [], []>} : vector<16x768xf32>, vector<768x16xf32>, vector<16x16xf32> -> vector<16x16xf32>
    %cst_21 = arith.constant dense<0xFF800000> : vector<16xf32>
    %42 = vector.multi_reduction <maximumf>, %40, %cst_21 [1] : vector<16x16xf32> to vector<16xf32>
    %43 = vector.shape_cast %42 : vector<16xf32> to vector<16x1xf32>
    %44 = vector.broadcast %43 : vector<16x1xf32> to vector<16x16xf32>
    %45 = arith.subf %40, %44 : vector<16x16xf32>
    %46 = math.exp %45 : vector<16x16xf32>
    %47 = arith.mulf %46, %41 : vector<16x16xf32>
    %cst_22 = arith.constant dense<0.000000e+00> : vector<16xf32>
    %48 = vector.multi_reduction <add>, %47, %cst_22 [1] : vector<16x16xf32> to vector<16xf32>
    %49 = vector.shape_cast %48 : vector<16xf32> to vector<16x1xf32>
    %cst_23 = arith.constant dense<0.000000e+00> : vector<16xf32>
    %50 = vector.multi_reduction <add>, %46, %cst_23 [1] : vector<16x16xf32> to vector<16xf32>
    %51 = vector.shape_cast %50 : vector<16xf32> to vector<16x1xf32>
    %52 = tpu.reciprocal %51 {approx = true} : vector<16x1xf32> -> vector<16x1xf32>
    %53 = arith.mulf %49, %52 : vector<16x1xf32>
    %54 = vector.shape_cast %53 : vector<16x1xf32> to vector<16xf32>
    %c0_24 = arith.constant 0 : index
    %c1_25 = arith.constant 1 : index
    %c0_26 = arith.constant 0 : index
    %55 = vector.load %arg4[%c0_24, %c1_25, %c0_26] : memref<1x2x16xf32, #tpu.memory_space<vmem>>, vector<1x1x16xf32>
    %56 = vector.shape_cast %55 : vector<1x1x16xf32> to vector<16xf32>
    %57 = vector.shape_cast %54 : vector<16xf32> to vector<1x1x16xf32>
    tpu.vector_store %arg4[%c0_24, %c1_25, %c0_26], %57 {strides = array<i32>} : memref<1x2x16xf32, #tpu.memory_space<vmem>>, vector<1x1x16xf32>,
    return
  }
  func.func @transform_0(%arg0: i32) -> (i32, i32) {
    %c0_i32 = arith.constant 0 : i32
    %c0_i32_0 = arith.constant 0 : i32
    %c0_i32_1 = arith.constant 0 : i32
    return %c0_i32, %c0_i32_0 : i32, i32
  }
  func.func @transform_1(%arg0: i32) -> (i32, i32) {
    %c0_i32 = arith.constant 0 : i32
    %c0_i32_0 = arith.constant 0 : i32
    %c0_i32_1 = arith.constant 0 : i32
    return %c0_i32, %c0_i32_0 : i32, i32
  }
  func.func @transform_2(%arg0: i32) -> (i32, i32, i32) {
    %c0_i32 = arith.constant 0 : i32
    %c0_i32_0 = arith.constant 0 : i32
    %c0_i32_1 = arith.constant 0 : i32
    return %arg0, %c0_i32, %c0_i32_0 : i32, i32, i32
  }
  func.func @transform_3(%arg0: i32) -> (i32, i32, i32) {
    %c0_i32 = arith.constant 0 : i32
    %c0_i32_0 = arith.constant 0 : i32
    %c0_i32_1 = arith.constant 0 : i32
    return %arg0, %c0_i32, %c0_i32_0 : i32, i32, i32
  }
}

</mosaic_0001>

<llo_original>
// kernel: tpu_custom_call.1
$region0: #{tpu_custom_call.1}
  #allocation0 [shape = 'u32[]', space=smem, size = 0x4, offset = 0x4, fixed_abs, tag = 'smem constant byte address 0x4 - core index']
  #allocation1 [shape = 'u32[144,128]{1,0:T(1,128)}', space=vmem, size = 0x12000, scoped, tag = 'internal scratch']
  %s0 = inlined_call_operand.vmem [shape: f32[16,768], index: 0, kind: input, shape index: {}]
  %s1 = inlined_call_operand.vmem [shape: f32[16,768], index: 1, kind: input, shape index: {}]
  %s2 = inlined_call_operand.vmem [shape: f32[2,768,16], index: 2, kind: input, shape index: {}]
  %s3 = inlined_call_operand.hbm [shape: f32[1,2,16], index: 3, kind: output, shape index: {}]
  %s4 = sld [smem:[#allocation0]]
  $region22: #{tpu_custom_call.1} parent=0
    _
  %s6 = ssub.s32 1, %s4
  %s7 = scalar_select 0, %s6, %s4
  $region1: #{tpu_custom_call.1} parent=0
    #allocation2 [shape = 'u8[1024]{0}', space=vmem, size = 0x400, scoped, tag = 'output window, operand 0, single buffered']
    #allocation3 [shape = 's32[1]{0}', space=sflag, size = 0x4, scoped, tag = 'scoped memory for tpu_custom_call.1']
    %8 = vsyncpa [#allocation3], 0
    // Predicated region
    $region2: #{tpu_custom_call.1} parent=1 // pred_check
      _
    $region3: #{tpu_custom_call.1} parent=1 // pred_check_branch
      %10 = sbr.rel (0) target = $region5
    $region4: #{tpu_custom_call.1} parent=1 // pred_region
      _
    $region5: #{tpu_custom_call.1} parent=1 // pred_fallthru
      _
    // Predicated region
    $region6: #{tpu_custom_call.1} parent=1 // pred_check
      _
    $region7: #{tpu_custom_call.1} parent=1 // pred_check_branch
      %12 = sbr.rel (0) target = $region9
    $region8: #{tpu_custom_call.1} parent=1 // pred_region
      _
    $region9: #{tpu_custom_call.1} parent=1 // pred_fallthru
      _
    // Predicated region
    $region10: #{tpu_custom_call.1} parent=1 // pred_check
      _
    $region11: #{tpu_custom_call.1} parent=1 // pred_check_branch
      %14 = sbr.rel (0) target = $region13
    $region12: #{tpu_custom_call.1} parent=1 // pred_region
      _
    $region13: #{tpu_custom_call.1} parent=1 // pred_fallthru
      _
    %v15 = vld [vmem:[%s0] sm:$0xff]
    %v16 = vld [vmem:[%s0 + $0x8] sm:$0xff]
    %v17 = vld [vmem:[%s0 + $0x10] sm:$0xff]
    %v18 = vld [vmem:[%s0 + $0x18] sm:$0xff]
    %v19 = vld [vmem:[%s0 + $0x20] sm:$0xff]
    %v20 = vld [vmem:[%s0 + $0x28] sm:$0xff]
    %v21 = vld [vmem:[%s0 + $0x30] sm:$0xff]
    %v22 = vld [vmem:[%s0 + $0x38] sm:$0xff]
    %v23 = vld [vmem:[%s0 + $0x40] sm:$0xff]
    %v24 = vld [vmem:[%s0 + $0x48] sm:$0xff]
    %v25 = vld [vmem:[%s0 + $0x50] sm:$0xff]
    %v26 = vld [vmem:[%s0 + $0x58] sm:$0xff]
    %v27 = vld [vmem:[%s1] sm:$0xff]
    %v28 = vld [vmem:[%s1 + $0x8] sm:$0xff]
    %v29 = vld [vmem:[%s1 + $0x10] sm:$0xff]
    %v30 = vld [vmem:[%s1 + $0x18] sm:$0xff]
    %v31 = vld [vmem:[%s1 + $0x20] sm:$0xff]
    %v32 = vld [vmem:[%s1 + $0x28] sm:$0xff]
    %v33 = vld [vmem:[%s1 + $0x30] sm:$0xff]
    %v34 = vld [vmem:[%s1 + $0x38] sm:$0xff]
    %v35 = vld [vmem:[%s1 + $0x40] sm:$0xff]
    %v36 = vld [vmem:[%s1 + $0x48] sm:$0xff]
    %v37 = vld [vmem:[%s1 + $0x50] sm:$0xff]
    %v38 = vld [vmem:[%s1 + $0x58] sm:$0xff]
    %v39 = vld [vmem:[%s2] sm:$0xff]
    %v40 = vld [vmem:[%s2 + $0x8] sm:$0xff]
    %v41 = vld [vmem:[%s2 + $0x10] sm:$0xff]
    %v42 = vld [vmem:[%s2 + $0x18] sm:$0xff]
    %v43 = vld [vmem:[%s2 + $0x20] sm:$0xff]
    %v44 = vld [vmem:[%s2 + $0x28] sm:$0xff]
    %v45 = vld [vmem:[%s2 + $0x30] sm:$0xff]
    %v46 = vld [vmem:[%s2 + $0x38] sm:$0xff]
    %v47 = vld [vmem:[%s2 + $0x40] sm:$0xff]
    %v48 = vld [vmem:[%s2 + $0x48] sm:$0xff]
    %v49 = vld [vmem:[%s2 + $0x50] sm:$0xff]
    %v50 = vld [vmem:[%s2 + $0x58] sm:$0xff]
    %v51 = vld [vmem:[%s2 + $0x60] sm:$0xff]
    %v52 = vld [vmem:[%s2 + $0x68] sm:$0xff]
    %v53 = vld [vmem:[%s2 + $0x70] sm:$0xff]
    %v54 = vld [vmem:[%s2 + $0x78] sm:$0xff]
    %v55 = vld [vmem:[%s2 + $0x80] sm:$0xff]
    %v56 = vld [vmem:[%s2 + $0x88] sm:$0xff]
    %v57 = vld [vmem:[%s2 + $0x90] sm:$0xff]
    %v58 = vld [vmem:[%s2 + $0x98] sm:$0xff]
    %v59 = vld [vmem:[%s2 + $0xa0] sm:$0xff]
    %v60 = vld [vmem:[%s2 + $0xa8] sm:$0xff]
    %v61 = vld [vmem:[%s2 + $0xb0] sm:$0xff]
    %v62 = vld [vmem:[%s2 + $0xb8] sm:$0xff]
    %v63 = vld [vmem:[%s2 + $0xc0] sm:$0xff]
    %v64 = vld [vmem:[%s2 + $0xc8] sm:$0xff]
    %v65 = vld [vmem:[%s2 + $0xd0] sm:$0xff]
    %v66 = vld [vmem:[%s2 + $0xd8] sm:$0xff]
    %v67 = vld [vmem:[%s2 + $0xe0] sm:$0xff]
    %v68 = vld [vmem:[%s2 + $0xe8] sm:$0xff]
    %v69 = vld [vmem:[%s2 + $0xf0] sm:$0xff]
    %v70 = vld [vmem:[%s2 + $0xf8] sm:$0xff]
    %v71 = vld [vmem:[%s2 + $0x100] sm:$0xff]
    %v72 = vld [vmem:[%s2 + $0x108] sm:$0xff]
    %v73 = vld [vmem:[%s2 + $0x110] sm:$0xff]
    %v74 = vld [vmem:[%s2 + $0x118] sm:$0xff]
    %v75 = vld [vmem:[%s2 + $0x120] sm:$0xff]
    %v76 = vld [vmem:[%s2 + $0x128] sm:$0xff]
    %v77 = vld [vmem:[%s2 + $0x130] sm:$0xff]
    %v78 = vld [vmem:[%s2 + $0x138] sm:$0xff]
    %v79 = vld [vmem:[%s2 + $0x140] sm:$0xff]
    %v80 = vld [vmem:[%s2 + $0x148] sm:$0xff]
    %v81 = vld [vmem:[%s2 + $0x150] sm:$0xff]
    %v82 = vld [vmem:[%s2 + $0x158] sm:$0xff]
    %v83 = vld [vmem:[%s2 + $0x160] sm:$0xff]
    %v84 = vld [vmem:[%s2 + $0x168] sm:$0xff]
    %v85 = vld [vmem:[%s2 + $0x170] sm:$0xff]
    %v86 = vld [vmem:[%s2 + $0x178] sm:$0xff]
    %v87 = vld [vmem:[%s2 + $0x180] sm:$0xff]
    %v88 = vld [vmem:[%s2 + $0x188] sm:$0xff]
    %v89 = vld [vmem:[%s2 + $0x190] sm:$0xff]
    %v90 = vld [vmem:[%s2 + $0x198] sm:$0xff]
    %v91 = vld [vmem:[%s2 + $0x1a0] sm:$0xff]
    %v92 = vld [vmem:[%s2 + $0x1a8] sm:$0xff]
    %v93 = vld [vmem:[%s2 + $0x1b0] sm:$0xff]
    %v94 = vld [vmem:[%s2 + $0x1b8] sm:$0xff]
    %v95 = vld [vmem:[%s2 + $0x1c0] sm:$0xff]
    %v96 = vld [vmem:[%s2 + $0x1c8] sm:$0xff]
    %v97 = vld [vmem:[%s2 + $0x1d0] sm:$0xff]
    %v98 = vld [vmem:[%s2 + $0x1d8] sm:$0xff]
    %v99 = vld [vmem:[%s2 + $0x1e0] sm:$0xff]
    %v100 = vld [vmem:[%s2 + $0x1e8] sm:$0xff]
    %v101 = vld [vmem:[%s2 + $0x1f0] sm:$0xff]
    %v102 = vld [vmem:[%s2 + $0x1f8] sm:$0xff]
    %v103 = vld [vmem:[%s2 + $0x200] sm:$0xff]
    %v104 = vld [vmem:[%s2 + $0x208] sm:$0xff]
    %v105 = vld [vmem:[%s2 + $0x210] sm:$0xff]
    %v106 = vld [vmem:[%s2 + $0x218] sm:$0xff]
    %v107 = vld [vmem:[%s2 + $0x220] sm:$0xff]
    %v108 = vld [vmem:[%s2 + $0x228] sm:$0xff]
    %v109 = vld [vmem:[%s2 + $0x230] sm:$0xff]
    %v110 = vld [vmem:[%s2 + $0x238] sm:$0xff]
    %v111 = vld [vmem:[%s2 + $0x240] sm:$0xff]
    %v112 = vld [vmem:[%s2 + $0x248] sm:$0xff]
    %v113 = vld [vmem:[%s2 + $0x250] sm:$0xff]
    %v114 = vld [vmem:[%s2 + $0x258] sm:$0xff]
    %v115 = vld [vmem:[%s2 + $0x260] sm:$0xff]
    %v116 = vld [vmem:[%s2 + $0x268] sm:$0xff]
    %v117 = vld [vmem:[%s2 + $0x270] sm:$0xff]
    %v118 = vld [vmem:[%s2 + $0x278] sm:$0xff]
    %v119 = vld [vmem:[%s2 + $0x280] sm:$0xff]
    %v120 = vld [vmem:[%s2 + $0x288] sm:$0xff]
    %v121 = vld [vmem:[%s2 + $0x290] sm:$0xff]
    %v122 = vld [vmem:[%s2 + $0x298] sm:$0xff]
    %v123 = vld [vmem:[%s2 + $0x2a0] sm:$0xff]
    %v124 = vld [vmem:[%s2 + $0x2a8] sm:$0xff]
    %v125 = vld [vmem:[%s2 + $0x2b0] sm:$0xff]
    %v126 = vld [vmem:[%s2 + $0x2b8] sm:$0xff]
    %v127 = vld [vmem:[%s2 + $0x2c0] sm:$0xff]
    %v128 = vld [vmem:[%s2 + $0x2c8] sm:$0xff]
    %v129 = vld [vmem:[%s2 + $0x2d0] sm:$0xff]
    %v130 = vld [vmem:[%s2 + $0x2d8] sm:$0xff]
    %v131 = vld [vmem:[%s2 + $0x2e0] sm:$0xff]
    %v132 = vld [vmem:[%s2 + $0x2e8] sm:$0xff]
    %v133 = vld [vmem:[%s2 + $0x2f0] sm:$0xff]
    %v134 = vld [vmem:[%s2 + $0x2f8] sm:$0xff]
    %v135 = vmul.f32 %v39, %v39
    %v136 = vmul.f32 %v40, %v40
    %v137 = vmul.f32 %v41, %v41
    %v138 = vmul.f32 %v42, %v42
    %v139 = vmul.f32 %v43, %v43
    %v140 = vmul.f32 %v44, %v44
    %v141 = vmul.f32 %v45, %v45
    %v142 = vmul.f32 %v46, %v46
    %v143 = vmul.f32 %v47, %v47
    %v144 = vmul.f32 %v48, %v48
    %v145 = vmul.f32 %v49, %v49
    %v146 = vmul.f32 %v50, %v50
    %v147 = vmul.f32 %v51, %v51
    %v148 = vmul.f32 %v52, %v52
    %v149 = vmul.f32 %v53, %v53
    %v150 = vmul.f32 %v54, %v54
    %v151 = vmul.f32 %v55, %v55
    %v152 = vmul.f32 %v56, %v56
    %v153 = vmul.f32 %v57, %v57
    %v154 = vmul.f32 %v58, %v58
    %v155 = vmul.f32 %v59, %v59
    %v156 = vmul.f32 %v60, %v60
    %v157 = vmul.f32 %v61, %v61
    %v158 = vmul.f32 %v62, %v62
    %v159 = vmul.f32 %v63, %v63
    %v160 = vmul.f32 %v64, %v64
    %v161 = vmul.f32 %v65, %v65
    %v162 = vmul.f32 %v66, %v66
    %v163 = vmul.f32 %v67, %v67
    %v164 = vmul.f32 %v68, %v68
    %v165 = vmul.f32 %v69, %v69
    %v166 = vmul.f32 %v70, %v70
    %v167 = vmul.f32 %v71, %v71
    %v168 = vmul.f32 %v72, %v72
    %v169 = vmul.f32 %v73, %v73
    %v170 = vmul.f32 %v74, %v74
    %v171 = vmul.f32 %v75, %v75
    %v172 = vmul.f32 %v76, %v76
    %v173 = vmul.f32 %v77, %v77
    %v174 = vmul.f32 %v78, %v78
    %v175 = vmul.f32 %v79, %v79
    %v176 = vmul.f32 %v80, %v80
    %v177 = vmul.f32 %v81, %v81
    %v178 = vmul.f32 %v82, %v82
    %v179 = vmul.f32 %v83, %v83
    %v180 = vmul.f32 %v84, %v84
    %v181 = vmul.f32 %v85, %v85
    %v182 = vmul.f32 %v86, %v86
    %v183 = vmul.f32 %v87, %v87
    %v184 = vmul.f32 %v88, %v88
    %v185 = vmul.f32 %v89, %v89
    %v186 = vmul.f32 %v90, %v90
    %v187 = vmul.f32 %v91, %v91
    %v188 = vmul.f32 %v92, %v92
    %v189 = vmul.f32 %v93, %v93
    %v190 = vmul.f32 %v94, %v94
    %v191 = vmul.f32 %v95, %v95
    %v192 = vmul.f32 %v96, %v96
    %v193 = vmul.f32 %v97, %v97
    %v194 = vmul.f32 %v98, %v98
    %v195 = vmul.f32 %v99, %v99
    %v196 = vmul.f32 %v100, %v100
    %v197 = vmul.f32 %v101, %v101
    %v198 = vmul.f32 %v102, %v102
    %v199 = vmul.f32 %v103, %v103
    %v200 = vmul.f32 %v104, %v104
    %v201 = vmul.f32 %v105, %v105
    %v202 = vmul.f32 %v106, %v106
    %v203 = vmul.f32 %v107, %v107
    %v204 = vmul.f32 %v108, %v108
    %v205 = vmul.f32 %v109, %v109
    %v206 = vmul.f32 %v110, %v110
    %v207 = vmul.f32 %v111, %v111
    %v208 = vmul.f32 %v112, %v112
    %v209 = vmul.f32 %v113, %v113
    %v210 = vmul.f32 %v114, %v114
    %v211 = vmul.f32 %v115, %v115
    %v212 = vmul.f32 %v116, %v116
    %v213 = vmul.f32 %v117, %v117
    %v214 = vmul.f32 %v118, %v118
    %v215 = vmul.f32 %v119, %v119
    %v216 = vmul.f32 %v120, %v120
    %v217 = vmul.f32 %v121, %v121
    %v218 = vmul.f32 %v122, %v122
    %v219 = vmul.f32 %v123, %v123
    %v220 = vmul.f32 %v124, %v124
    %v221 = vmul.f32 %v125, %v125
    %v222 = vmul.f32 %v126, %v126
    %v223 = vmul.f32 %v127, %v127
    %v224 = vmul.f32 %v128, %v128
    %v225 = vmul.f32 %v129, %v129
    %v226 = vmul.f32 %v130, %v130
    %v227 = vmul.f32 %v131, %v131
    %v228 = vmul.f32 %v132, %v132
    %v229 = vmul.f32 %v133, %v133
    %v230 = vmul.f32 %v134, %v134
    %vm231 = vcmask 130048
    %v232 = vsel %vm231, %v135, 0.0
    %v233 = vsel %vm231, %v136, 0.0
    %v234 = vadd.f32 %v232, %v233
    %v235 = vsel %vm231, %v137, 0.0
    %v236 = vadd.f32 %v234, %v235
    %v237 = vsel %vm231, %v138, 0.0
    %v238 = vadd.f32 %v236, %v237
    %v239 = vsel %vm231, %v139, 0.0
    %v240 = vadd.f32 %v238, %v239
    %v241 = vsel %vm231, %v140, 0.0
    %v242 = vadd.f32 %v240, %v241
    %v243 = vsel %vm231, %v141, 0.0
    %v244 = vadd.f32 %v242, %v243
    %v245 = vsel %vm231, %v142, 0.0
    %v246 = vadd.f32 %v244, %v245
    %v247 = vsel %vm231, %v143, 0.0
    %v248 = vadd.f32 %v246, %v247
    %v249 = vsel %vm231, %v144, 0.0
    %v250 = vadd.f32 %v248, %v249
    %v251 = vsel %vm231, %v145, 0.0
    %v252 = vadd.f32 %v250, %v251
    %v253 = vsel %vm231, %v146, 0.0
    %v254 = vadd.f32 %v252, %v253
    %v255 = vsel %vm231, %v147, 0.0
    %v256 = vadd.f32 %v254, %v255
    %v257 = vsel %vm231, %v148, 0.0
    %v258 = vadd.f32 %v256, %v257
    %v259 = vsel %vm231, %v149, 0.0
    %v260 = vadd.f32 %v258, %v259
    %v261 = vsel %vm231, %v150, 0.0
    %v262 = vadd.f32 %v260, %v261
    %v263 = vsel %vm231, %v151, 0.0
    %v264 = vadd.f32 %v262, %v263
    %v265 = vsel %vm231, %v152, 0.0
    %v266 = vadd.f32 %v264, %v265
    %v267 = vsel %vm231, %v153, 0.0
    %v268 = vadd.f32 %v266, %v267
    %v269 = vsel %vm231, %v154, 0.0
    %v270 = vadd.f32 %v268, %v269
    %v271 = vsel %vm231, %v155, 0.0
    %v272 = vadd.f32 %v270, %v271
    %v273 = vsel %vm231, %v156, 0.0
    %v274 = vadd.f32 %v272, %v273
    %v275 = vsel %vm231, %v157, 0.0
    %v276 = vadd.f32 %v274, %v275
    %v277 = vsel %vm231, %v158, 0.0
    %v278 = vadd.f32 %v276, %v277
    %v279 = vsel %vm231, %v159, 0.0
    %v280 = vadd.f32 %v278, %v279
    %v281 = vsel %vm231, %v160, 0.0
    %v282 = vadd.f32 %v280, %v281
    %v283 = vsel %vm231, %v161, 0.0
    %v284 = vadd.f32 %v282, %v283
    %v285 = vsel %vm231, %v162, 0.0
    %v286 = vadd.f32 %v284, %v285
    %v287 = vsel %vm231, %v163, 0.0
    %v288 = vadd.f32 %v286, %v287
    %v289 = vsel %vm231, %v164, 0.0
    %v290 = vadd.f32 %v288, %v289
    %v291 = vsel %vm231, %v165, 0.0
    %v292 = vadd.f32 %v290, %v291
    %v293 = vsel %vm231, %v166, 0.0
    %v294 = vadd.f32 %v292, %v293
    %v295 = vsel %vm231, %v167, 0.0
    %v296 = vadd.f32 %v294, %v295
    %v297 = vsel %vm231, %v168, 0.0
    %v298 = vadd.f32 %v296, %v297
    %v299 = vsel %vm231, %v169, 0.0
    %v300 = vadd.f32 %v298, %v299
    %v301 = vsel %vm231, %v170, 0.0
    %v302 = vadd.f32 %v300, %v301
    %v303 = vsel %vm231, %v171, 0.0
    %v304 = vadd.f32 %v302, %v303
    %v305 = vsel %vm231, %v172, 0.0
    %v306 = vadd.f32 %v304, %v305
    %v307 = vsel %vm231, %v173, 0.0
    %v308 = vadd.f32 %v306, %v307
    %v309 = vsel %vm231, %v174, 0.0
    %v310 = vadd.f32 %v308, %v309
    %v311 = vsel %vm231, %v175, 0.0
    %v312 = vadd.f32 %v310, %v311
    %v313 = vsel %vm231, %v176, 0.0
    %v314 = vadd.f32 %v312, %v313
    %v315 = vsel %vm231, %v177, 0.0
    %v316 = vadd.f32 %v314, %v315
    %v317 = vsel %vm231, %v178, 0.0
    %v318 = vadd.f32 %v316, %v317
    %v319 = vsel %vm231, %v179, 0.0
    %v320 = vadd.f32 %v318, %v319
    %v321 = vsel %vm231, %v180, 0.0
    %v322 = vadd.f32 %v320, %v321
    %v323 = vsel %vm231, %v181, 0.0
    %v324 = vadd.f32 %v322, %v323
    %v325 = vsel %vm231, %v182, 0.0
    %v326 = vadd.f32 %v324, %v325
    %v327 = vsel %vm231, %v183, 0.0
    %v328 = vadd.f32 %v326, %v327
    %v329 = vsel %vm231, %v184, 0.0
    %v330 = vadd.f32 %v328, %v329
    %v331 = vsel %vm231, %v185, 0.0
    %v332 = vadd.f32 %v330, %v331
    %v333 = vsel %vm231, %v186, 0.0
    %v334 = vadd.f32 %v332, %v333
    %v335 = vsel %vm231, %v187, 0.0
    %v336 = vadd.f32 %v334, %v335
    %v337 = vsel %vm231, %v188, 0.0
    %v338 = vadd.f32 %v336, %v337
    %v339 = vsel %vm231, %v189, 0.0
    %v340 = vadd.f32 %v338, %v339
    %v341 = vsel %vm231, %v190, 0.0
    %v342 = vadd.f32 %v340, %v341
    %v343 = vsel %vm231, %v191, 0.0
    %v344 = vadd.f32 %v342, %v343
    %v345 = vsel %vm231, %v192, 0.0
    %v346 = vadd.f32 %v344, %v345
    %v347 = vsel %vm231, %v193, 0.0
    %v348 = vadd.f32 %v346, %v347
    %v349 = vsel %vm231, %v194, 0.0
    %v350 = vadd.f32 %v348, %v349
    %v351 = vsel %vm231, %v195, 0.0
    %v352 = vadd.f32 %v350, %v351
    %v353 = vsel %vm231, %v196, 0.0
    %v354 = vadd.f32 %v352, %v353
    %v355 = vsel %vm231, %v197, 0.0
    %v356 = vadd.f32 %v354, %v355
    %v357 = vsel %vm231, %v198, 0.0
    %v358 = vadd.f32 %v356, %v357
    %v359 = vsel %vm231, %v199, 0.0
    %v360 = vadd.f32 %v358, %v359
    %v361 = vsel %vm231, %v200, 0.0
    %v362 = vadd.f32 %v360, %v361
    %v363 = vsel %vm231, %v201, 0.0
    %v364 = vadd.f32 %v362, %v363
    %v365 = vsel %vm231, %v202, 0.0
    %v366 = vadd.f32 %v364, %v365
    %v367 = vsel %vm231, %v203, 0.0
    %v368 = vadd.f32 %v366, %v367
    %v369 = vsel %vm231, %v204, 0.0
    %v370 = vadd.f32 %v368, %v369
    %v371 = vsel %vm231, %v205, 0.0
    %v372 = vadd.f32 %v370, %v371
    %v373 = vsel %vm231, %v206, 0.0
    %v374 = vadd.f32 %v372, %v373
    %v375 = vsel %vm231, %v207, 0.0
    %v376 = vadd.f32 %v374, %v375
    %v377 = vsel %vm231, %v208, 0.0
    %v378 = vadd.f32 %v376, %v377
    %v379 = vsel %vm231, %v209, 0.0
    %v380 = vadd.f32 %v378, %v379
    %v381 = vsel %vm231, %v210, 0.0
    %v382 = vadd.f32 %v380, %v381
    %v383 = vsel %vm231, %v211, 0.0
    %v384 = vadd.f32 %v382, %v383
    %v385 = vsel %vm231, %v212, 0.0
    %v386 = vadd.f32 %v384, %v385
    %v387 = vsel %vm231, %v213, 0.0
    %v388 = vadd.f32 %v386, %v387
    %v389 = vsel %vm231, %v214, 0.0
    %v390 = vadd.f32 %v388, %v389
    %v391 = vsel %vm231, %v215, 0.0
    %v392 = vadd.f32 %v390, %v391
    %v393 = vsel %vm231, %v216, 0.0
    %v394 = vadd.f32 %v392, %v393
    %v395 = vsel %vm231, %v217, 0.0
    %v396 = vadd.f32 %v394, %v395
    %v397 = vsel %vm231, %v218, 0.0
    %v398 = vadd.f32 %v396, %v397
    %v399 = vsel %vm231, %v219, 0.0
    %v400 = vadd.f32 %v398, %v399
    %v401 = vsel %vm231, %v220, 0.0
    %v402 = vadd.f32 %v400, %v401
    %v403 = vsel %vm231, %v221, 0.0
    %v404 = vadd.f32 %v402, %v403
    %v405 = vsel %vm231, %v222, 0.0
    %v406 = vadd.f32 %v404, %v405
    %v407 = vsel %vm231, %v223, 0.0
    %v408 = vadd.f32 %v406, %v407
    %v409 = vsel %vm231, %v224, 0.0
    %v410 = vadd.f32 %v408, %v409
    %v411 = vsel %vm231, %v225, 0.0
    %v412 = vadd.f32 %v410, %v411
    %v413 = vsel %vm231, %v226, 0.0
    %v414 = vadd.f32 %v412, %v413
    %v415 = vsel %vm231, %v227, 0.0
    %v416 = vadd.f32 %v414, %v415
    %v417 = vsel %vm231, %v228, 0.0
    %v418 = vadd.f32 %v416, %v417
    %v419 = vsel %vm231, %v229, 0.0
    %v420 = vadd.f32 %v418, %v419
    %v421 = vsel %vm231, %v230, 0.0
    %v422 = vadd.f32 %v420, %v421
    %v423 = vrot.slane %v422, 4
    %v424 = vadd.f32 %v422, %v423
    %v425 = vrot.slane %v424, 2
    %v426 = vadd.f32 %v424, %v425
    %v427 = vrot.slane %v426, 1
    %v428 = vadd.f32 %v426, %v427
    %v429 = vmax.f32 %v428, 1e-24
    %v430 = vrsqrt.pop %v429
    %v431 = vmul.f32 %v39, %v430
    %v432 = vmul.f32 %v40, %v430
    %v433 = vmul.f32 %v41, %v430
    %v434 = vmul.f32 %v42, %v430
    %v435 = vmul.f32 %v43, %v430
    %v436 = vmul.f32 %v44, %v430
    %v437 = vmul.f32 %v45, %v430
    %v438 = vmul.f32 %v46, %v430
    %v439 = vmul.f32 %v47, %v430
    %v440 = vmul.f32 %v48, %v430
    %v441 = vmul.f32 %v49, %v430
    %v442 = vmul.f32 %v50, %v430
    %v443 = vmul.f32 %v51, %v430
    %v444 = vmul.f32 %v52, %v430
    %v445 = vmul.f32 %v53, %v430
    %v446 = vmul.f32 %v54, %v430
    %v447 = vmul.f32 %v55, %v430
    %v448 = vmul.f32 %v56, %v430
    %v449 = vmul.f32 %v57, %v430
    %v450 = vmul.f32 %v58, %v430
    %v451 = vmul.f32 %v59, %v430
    %v452 = vmul.f32 %v60, %v430
    %v453 = vmul.f32 %v61, %v430
    %v454 = vmul.f32 %v62, %v430
    %v455 = vmul.f32 %v63, %v430
    %v456 = vmul.f32 %v64, %v430
    %v457 = vmul.f32 %v65, %v430
    %v458 = vmul.f32 %v66, %v430
    %v459 = vmul.f32 %v67, %v430
    %v460 = vmul.f32 %v68, %v430
    %v461 = vmul.f32 %v69, %v430
    %v462 = vmul.f32 %v70, %v430
    %v463 = vmul.f32 %v71, %v430
    %v464 = vmul.f32 %v72, %v430
    %v465 = vmul.f32 %v73, %v430
    %v466 = vmul.f32 %v74, %v430
    %v467 = vmul.f32 %v75, %v430
    %v468 = vmul.f32 %v76, %v430
    %v469 = vmul.f32 %v77, %v430
    %v470 = vmul.f32 %v78, %v430
    %v471 = vmul.f32 %v79, %v430
    %v472 = vmul.f32 %v80, %v430
    %v473 = vmul.f32 %v81, %v430
    %v474 = vmul.f32 %v82, %v430
    %v475 = vmul.f32 %v83, %v430
    %v476 = vmul.f32 %v84, %v430
    %v477 = vmul.f32 %v85, %v430
    %v478 = vmul.f32 %v86, %v430
    %v479 = vmul.f32 %v87, %v430
    %v480 = vmul.f32 %v88, %v430
    %v481 = vmul.f32 %v89, %v430
    %v482 = vmul.f32 %v90, %v430
    %v483 = vmul.f32 %v91, %v430
    %v484 = vmul.f32 %v92, %v430
    %v485 = vmul.f32 %v93, %v430
    %v486 = vmul.f32 %v94, %v430
    %v487 = vmul.f32 %v95, %v430
    %v488 = vmul.f32 %v96, %v430
    %v489 = vmul.f32 %v97, %v430
    %v490 = vmul.f32 %v98, %v430
    %v491 = vmul.f32 %v99, %v430
    %v492 = vmul.f32 %v100, %v430
    %v493 = vmul.f32 %v101, %v430
    %v494 = vmul.f32 %v102, %v430
    %v495 = vmul.f32 %v103, %v430
    %v496 = vmul.f32 %v104, %v430
    %v497 = vmul.f32 %v105, %v430
    %v498 = vmul.f32 %v106, %v430
    %v499 = vmul.f32 %v107, %v430
    %v500 = vmul.f32 %v108, %v430
    %v501 = vmul.f32 %v109, %v430
    %v502 = vmul.f32 %v110, %v430
    %v503 = vmul.f32 %v111, %v430
    %v504 = vmul.f32 %v112, %v430
    %v505 = vmul.f32 %v113, %v430
    %v506 = vmul.f32 %v114, %v430
    %v507 = vmul.f32 %v115, %v430
    %v508 = vmul.f32 %v116, %v430
    %v509 = vmul.f32 %v117, %v430
    %v510 = vmul.f32 %v118, %v430
    %v511 = vmul.f32 %v119, %v430
    %v512 = vmul.f32 %v120, %v430
    %v513 = vmul.f32 %v121, %v430
    %v514 = vmul.f32 %v122, %v430
    %v515 = vmul.f32 %v123, %v430
    %v516 = vmul.f32 %v124, %v430
    %v517 = vmul.f32 %v125, %v430
    %v518 = vmul.f32 %v126, %v430
    %v519 = vmul.f32 %v127, %v430
    %v520 = vmul.f32 %v128, %v430
    %v521 = vmul.f32 %v129, %v430
    %v522 = vmul.f32 %v130, %v430
    %v523 = vmul.f32 %v131, %v430
    %v524 = vmul.f32 %v132, %v430
    %v525 = vmul.f32 %v133, %v430
    %v526 = vmul.f32 %v134, %v430
    %527 = vmatprep.subr.mxu0 0.0
    %528 = vmatpush1.msra.mxu0 %v431
    %529 = vmatprep.subr.mxu0 0.0
    %530 = vmatpush1.msra.mxu0 %v432
    %531 = vmatprep.subr.mxu0 0.0
    %532 = vmatpush1.msra.mxu0 %v433
    %533 = vmatprep.subr.mxu0 0.0
    %534 = vmatpush1.msra.mxu0 %v434
    %535 = vmatprep.subr.mxu0 0.0
    %536 = vmatpush1.msra.mxu0 %v435
    %537 = vmatprep.subr.mxu0 0.0
    %538 = vmatpush1.msra.mxu0 %v436
    %539 = vmatprep.subr.mxu0 0.0
    %540 = vmatpush1.msra.mxu0 %v437
    %541 = vmatprep.subr.mxu0 0.0
    %542 = vmatpush1.msra.mxu0 %v438
    %543 = vmatprep.subr.mxu0 0.0
    %544 = vmatpush1.msra.mxu0 %v439
    %545 = vmatprep.subr.mxu0 0.0
    %546 = vmatpush1.msra.mxu0 %v440
    %547 = vmatprep.subr.mxu0 0.0
    %548 = vmatpush1.msra.mxu0 %v441
    %549 = vmatprep.subr.mxu0 0.0
    %550 = vmatpush1.msra.mxu0 %v442
    %551 = vmatprep.subr.mxu0 0.0
    %552 = vmatpush1.msra.mxu0 %v443
    %553 = vmatprep.subr.mxu0 0.0
    %554 = vmatpush1.msra.mxu0 %v444
    %555 = vmatprep.subr.mxu0 0.0
    %556 = vmatpush1.msra.mxu0 %v445
    %557 = vmatprep.subr.mxu0 0.0
    %558 = vmatpush1.msra.mxu0 %v446
    %559 = vmatprep.subr.mxu0 0.0
    %560 = vmatpush1.msra.mxu0 %v447
    %561 = vmatprep.subr.mxu0 0.0
    %562 = vmatpush1.msra.mxu0 %v448
    %563 = vmatprep.subr.mxu0 0.0
    %564 = vmatpush1.msra.mxu0 %v449
    %565 = vmatprep.subr.mxu0 0.0
    %566 = vmatpush1.msra.mxu0 %v450
    %567 = vmatprep.subr.mxu0 0.0
    %568 = vmatpush1.msra.mxu0 %v451
    %569 = vmatprep.subr.mxu0 0.0
    %570 = vmatpush1.msra.mxu0 %v452
    %571 = vmatprep.subr.mxu0 0.0
    %572 = vmatpush1.msra.mxu0 %v453
    %573 = vmatprep.subr.mxu0 0.0
    %574 = vmatpush1.msra.mxu0 %v454
    %575 = vmatprep.subr.mxu0 0.0
    %576 = vmatpush1.msra.mxu0 %v455
    %577 = vmatprep.subr.mxu0 0.0
    %578 = vmatpush1.msra.mxu0 %v456
    %579 = vmatprep.subr.mxu0 0.0
    %580 = vmatpush1.msra.mxu0 %v457
    %581 = vmatprep.subr.mxu0 0.0
    %582 = vmatpush1.msra.mxu0 %v458
    %583 = vmatprep.subr.mxu0 0.0
    %584 = vmatpush1.msra.mxu0 %v459
    %585 = vmatprep.subr.mxu0 0.0
    %586 = vmatpush1.msra.mxu0 %v460
    %587 = vmatprep.subr.mxu0 0.0
    %588 = vmatpush1.msra.mxu0 %v461
    %589 = vmatprep.subr.mxu0 0.0
    %590 = vmatpush1.msra.mxu0 %v462
    %591 = vmatprep.mubr.f32.mxu0 %v16
    %592 = vmatmul.mubr.f32.gmra.mrb[0].mxu0 %v15
    %v593 = vpop.f32.mrb[0].mxu0
    %v594 = vadd.f32 0.0, %v593
    %v595 = vpop.f32.mrb[0].mxu0
    %596 = vmatprep.mubr.f32.mxu0 %v22
    %597 = vmatmul.mubr.f32.gmra.mrb[0].mxu0 %v21
    %v598 = vpop.f32.mrb[0].mxu0
    %v599 = vadd.f32 0.0, %v598
    %v600 = vpop.f32.mrb[0].mxu0
    %601 = vdwg.mxu0
    %602 = vmatprep.subr.mxu0 0.0
    %603 = vmatpush1.msra.mxu0 %v463
    %604 = vmatprep.subr.mxu0 0.0
    %605 = vmatpush1.msra.mxu0 %v464
    %606 = vmatprep.subr.mxu0 0.0
    %607 = vmatpush1.msra.mxu0 %v465
    %608 = vmatprep.subr.mxu0 0.0
    %609 = vmatpush1.msra.mxu0 %v466
    %610 = vmatprep.subr.mxu0 0.0
    %611 = vmatpush1.msra.mxu0 %v467
    %612 = vmatprep.subr.mxu0 0.0
    %613 = vmatpush1.msra.mxu0 %v468
    %614 = vmatprep.subr.mxu0 0.0
    %615 = vmatpush1.msra.mxu0 %v469
    %616 = vmatprep.subr.mxu0 0.0
    %617 = vmatpush1.msra.mxu0 %v470
    %618 = vmatprep.subr.mxu0 0.0
    %619 = vmatpush1.msra.mxu0 %v471
    %620 = vmatprep.subr.mxu0 0.0
    %621 = vmatpush1.msra.mxu0 %v472
    %622 = vmatprep.subr.mxu0 0.0
    %623 = vmatpush1.msra.mxu0 %v473
    %624 = vmatprep.subr.mxu0 0.0
    %625 = vmatpush1.msra.mxu0 %v474
    %626 = vmatprep.subr.mxu0 0.0
    %627 = vmatpush1.msra.mxu0 %v475
    %628 = vmatprep.subr.mxu0 0.0
    %629 = vmatpush1.msra.mxu0 %v476
    %630 = vmatprep.subr.mxu0 0.0
    %631 = vmatpush1.msra.mxu0 %v477
    %632 = vmatprep.subr.mxu0 0.0
    %633 = vmatpush1.msra.mxu0 %v478
    %634 = vmatprep.subr.mxu0 0.0
    %635 = vmatpush1.msra.mxu0 %v479
    %636 = vmatprep.subr.mxu0 0.0
    %637 = vmatpush1.msra.mxu0 %v480
    %638 = vmatprep.subr.mxu0 0.0
    %639 = vmatpush1.msra.mxu0 %v481
    %640 = vmatprep.subr.mxu0 0.0
    %641 = vmatpush1.msra.mxu0 %v482
    %642 = vmatprep.subr.mxu0 0.0
    %643 = vmatpush1.msra.mxu0 %v483
    %644 = vmatprep.subr.mxu0 0.0
    %645 = vmatpush1.msra.mxu0 %v484
    %646 = vmatprep.subr.mxu0 0.0
    %647 = vmatpush1.msra.mxu0 %v485
    %648 = vmatprep.subr.mxu0 0.0
    %649 = vmatpush1.msra.mxu0 %v486
    %650 = vmatprep.subr.mxu0 0.0
    %651 = vmatpush1.msra.mxu0 %v487
    %652 = vmatprep.subr.mxu0 0.0
    %653 = vmatpush1.msra.mxu0 %v488
    %654 = vmatprep.subr.mxu0 0.0
    %655 = vmatpush1.msra.mxu0 %v489
    %656 = vmatprep.subr.mxu0 0.0
    %657 = vmatpush1.msra.mxu0 %v490
    %658 = vmatprep.subr.mxu0 0.0
    %659 = vmatpush1.msra.mxu0 %v491
    %660 = vmatprep.subr.mxu0 0.0
    %661 = vmatpush1.msra.mxu0 %v492
    %662 = vmatprep.subr.mxu0 0.0
    %663 = vmatpush1.msra.mxu0 %v493
    %664 = vmatprep.subr.mxu0 0.0
    %665 = vmatpush1.msra.mxu0 %v494
    %666 = vmatprep.mubr.f32.mxu0 %v18
    %667 = vmatmul.mubr.f32.gmra.mrb[0].mxu0 %v17
    %v668 = vpop.f32.mrb[0].mxu0
    %v669 = vadd.f32 %v594, %v668
    %v670 = vpop.f32.mrb[0].mxu0
    %671 = vmatprep.mubr.f32.mxu0 %v24
    %672 = vmatmul.mubr.f32.gmra.mrb[0].mxu0 %v23
    %v673 = vpop.f32.mrb[0].mxu0
    %v674 = vadd.f32 %v599, %v673
    %v675 = vpop.f32.mrb[0].mxu0
    %676 = vdwg.mxu0
    %677 = vmatprep.subr.mxu0 0.0
    %678 = vmatpush1.msra.mxu0 %v495
    %679 = vmatprep.subr.mxu0 0.0
    %680 = vmatpush1.msra.mxu0 %v496
    %681 = vmatprep.subr.mxu0 0.0
    %682 = vmatpush1.msra.mxu0 %v497
    %683 = vmatprep.subr.mxu0 0.0
    %684 = vmatpush1.msra.mxu0 %v498
    %685 = vmatprep.subr.mxu0 0.0
    %686 = vmatpush1.msra.mxu0 %v499
    %687 = vmatprep.subr.mxu0 0.0
    %688 = vmatpush1.msra.mxu0 %v500
    %689 = vmatprep.subr.mxu0 0.0
    %690 = vmatpush1.msra.mxu0 %v501
    %691 = vmatprep.subr.mxu0 0.0
    %692 = vmatpush1.msra.mxu0 %v502
    %693 = vmatprep.subr.mxu0 0.0
    %694 = vmatpush1.msra.mxu0 %v503
    %695 = vmatprep.subr.mxu0 0.0
    %696 = vmatpush1.msra.mxu0 %v504
    %697 = vmatprep.subr.mxu0 0.0
    %698 = vmatpush1.msra.mxu0 %v505
    %699 = vmatprep.subr.mxu0 0.0
    %700 = vmatpush1.msra.mxu0 %v506
    %701 = vmatprep.subr.mxu0 0.0
    %702 = vmatpush1.msra.mxu0 %v507
    %703 = vmatprep.subr.mxu0 0.0
    %704 = vmatpush1.msra.mxu0 %v508
    %705 = vmatprep.subr.mxu0 0.0
    %706 = vmatpush1.msra.mxu0 %v509
    %707 = vmatprep.subr.mxu0 0.0
    %708 = vmatpush1.msra.mxu0 %v510
    %709 = vmatprep.subr.mxu0 0.0
    %710 = vmatpush1.msra.mxu0 %v511
    %711 = vmatprep.subr.mxu0 0.0
    %712 = vmatpush1.msra.mxu0 %v512
    %713 = vmatprep.subr.mxu0 0.0
    %714 = vmatpush1.msra.mxu0 %v513
    %715 = vmatprep.subr.mxu0 0.0
    %716 = vmatpush1.msra.mxu0 %v514
    %717 = vmatprep.subr.mxu0 0.0
    %718 = vmatpush1.msra.mxu0 %v515
    %719 = vmatprep.subr.mxu0 0.0
    %720 = vmatpush1.msra.mxu0 %v516
    %721 = vmatprep.subr.mxu0 0.0
    %722 = vmatpush1.msra.mxu0 %v517
    %723 = vmatprep.subr.mxu0 0.0
    %724 = vmatpush1.msra.mxu0 %v518
    %725 = vmatprep.subr.mxu0 0.0
    %726 = vmatpush1.msra.mxu0 %v519
    %727 = vmatprep.subr.mxu0 0.0
    %728 = vmatpush1.msra.mxu0 %v520
    %729 = vmatprep.subr.mxu0 0.0
    %730 = vmatpush1.msra.mxu0 %v521
    %731 = vmatprep.subr.mxu0 0.0
    %732 = vmatpush1.msra.mxu0 %v522
    %733 = vmatprep.subr.mxu0 0.0
    %734 = vmatpush1.msra.mxu0 %v523
    %735 = vmatprep.subr.mxu0 0.0
    %736 = vmatpush1.msra.mxu0 %v524
    %737 = vmatprep.subr.mxu0 0.0
    %738 = vmatpush1.msra.mxu0 %v525
    %739 = vmatprep.subr.mxu0 0.0
    %740 = vmatpush1.msra.mxu0 %v526
    %741 = vmatprep.mubr.f32.mxu0 %v20
    %742 = vmatmul.mubr.f32.gmra.mrb[0].mxu0 %v19
    %v743 = vpop.f32.mrb[0].mxu0
    %v744 = vadd.f32 %v669, %v743
    %v745 = vpop.f32.mrb[0].mxu0
    %746 = vmatprep.mubr.f32.mxu0 %v26
    %747 = vmatmul.mubr.f32.gmra.mrb[0].mxu0 %v25
    %v748 = vpop.f32.mrb[0].mxu0
    %v749 = vadd.f32 %v674, %v748
    %v750 = vpop.f32.mrb[0].mxu0
    %751 = vdwg.mxu0
    %752 = vmatprep.subr.mxu0 0.0
    %753 = vmatpush1.msra.mxu0 %v431
    %754 = vmatprep.subr.mxu0 0.0
    %755 = vmatpush1.msra.mxu0 %v432
    %756 = vmatprep.subr.mxu0 0.0
    %757 = vmatpush1.msra.mxu0 %v433
    %758 = vmatprep.subr.mxu0 0.0
    %759 = vmatpush1.msra.mxu0 %v434
    %760 = vmatprep.subr.mxu0 0.0
    %761 = vmatpush1.msra.mxu0 %v435
    %762 = vmatprep.subr.mxu0 0.0
    %763 = vmatpush1.msra.mxu0 %v436
    %764 = vmatprep.subr.mxu0 0.0
    %765 = vmatpush1.msra.mxu0 %v437
    %766 = vmatprep.subr.mxu0 0.0
    %767 = vmatpush1.msra.mxu0 %v438
    %768 = vmatprep.subr.mxu0 0.0
    %769 = vmatpush1.msra.mxu0 %v439
    %770 = vmatprep.subr.mxu0 0.0
    %771 = vmatpush1.msra.mxu0 %v440
    %772 = vmatprep.subr.mxu0 0.0
    %773 = vmatpush1.msra.mxu0 %v441
    %774 = vmatprep.subr.mxu0 0.0
    %775 = vmatpush1.msra.mxu0 %v442
    %776 = vmatprep.subr.mxu0 0.0
    %777 = vmatpush1.msra.mxu0 %v443
    %778 = vmatprep.subr.mxu0 0.0
    %779 = vmatpush1.msra.mxu0 %v444
    %780 = vmatprep.subr.mxu0 0.0
    %781 = vmatpush1.msra.mxu0 %v445
    %782 = vmatprep.subr.mxu0 0.0
    %783 = vmatpush1.msra.mxu0 %v446
    %784 = vmatprep.subr.mxu0 0.0
    %785 = vmatpush1.msra.mxu0 %v447
    %786 = vmatprep.subr.mxu0 0.0
    %787 = vmatpush1.msra.mxu0 %v448
    %788 = vmatprep.subr.mxu0 0.0
    %789 = vmatpush1.msra.mxu0 %v449
    %790 = vmatprep.subr.mxu0 0.0
    %791 = vmatpush1.msra.mxu0 %v450
    %792 = vmatprep.subr.mxu0 0.0
    %793 = vmatpush1.msra.mxu0 %v451
    %794 = vmatprep.subr.mxu0 0.0
    %795 = vmatpush1.msra.mxu0 %v452
    %796 = vmatprep.subr.mxu0 0.0
    %797 = vmatpush1.msra.mxu0 %v453
    %798 = vmatprep.subr.mxu0 0.0
    %799 = vmatpush1.msra.mxu0 %v454
    %800 = vmatprep.subr.mxu0 0.0
    %801 = vmatpush1.msra.mxu0 %v455
    %802 = vmatprep.subr.mxu0 0.0
    %803 = vmatpush1.msra.mxu0 %v456
    %804 = vmatprep.subr.mxu0 0.0
    %805 = vmatpush1.msra.mxu0 %v457
    %806 = vmatprep.subr.mxu0 0.0
    %807 = vmatpush1.msra.mxu0 %v458
    %808 = vmatprep.subr.mxu0 0.0
    %809 = vmatpush1.msra.mxu0 %v459
    %810 = vmatprep.subr.mxu0 0.0
    %811 = vmatpush1.msra.mxu0 %v460
    %812 = vmatprep.subr.mxu0 0.0
    %813 = vmatpush1.msra.mxu0 %v461
    %814 = vmatprep.subr.mxu0 0.0
    %815 = vmatpush1.msra.mxu0 %v462
    %816 = vmatprep.mubr.f32.mxu0 %v28
    %817 = vmatmul.mubr.f32.gmra.mrb[0].mxu0 %v27
    %v818 = vpop.f32.mrb[0].mxu0
    %v819 = vadd.f32 0.0, %v818
    %v820 = vpop.f32.mrb[0].mxu0
    %821 = vmatprep.mubr.f32.mxu0 %v34
    %822 = vmatmul.mubr.f32.gmra.mrb[0].mxu0 %v33
    %v823 = vpop.f32.mrb[0].mxu0
    %v824 = vadd.f32 0.0, %v823
    %v825 = vpop.f32.mrb[0].mxu0
    %826 = vdwg.mxu0
    %827 = vmatprep.subr.mxu0 0.0
    %828 = vmatpush1.msra.mxu0 %v463
    %829 = vmatprep.subr.mxu0 0.0
    %830 = vmatpush1.msra.mxu0 %v464
    %831 = vmatprep.subr.mxu0 0.0
    %832 = vmatpush1.msra.mxu0 %v465
    %833 = vmatprep.subr.mxu0 0.0
    %834 = vmatpush1.msra.mxu0 %v466
    %835 = vmatprep.subr.mxu0 0.0
    %836 = vmatpush1.msra.mxu0 %v467
    %837 = vmatprep.subr.mxu0 0.0
    %838 = vmatpush1.msra.mxu0 %v468
    %839 = vmatprep.subr.mxu0 0.0
    %840 = vmatpush1.msra.mxu0 %v469
    %841 = vmatprep.subr.mxu0 0.0
    %842 = vmatpush1.msra.mxu0 %v470
    %843 = vmatprep.subr.mxu0 0.0
    %844 = vmatpush1.msra.mxu0 %v471
    %845 = vmatprep.subr.mxu0 0.0
    %846 = vmatpush1.msra.mxu0 %v472
    %847 = vmatprep.subr.mxu0 0.0
    %848 = vmatpush1.msra.mxu0 %v473
    %849 = vmatprep.subr.mxu0 0.0
    %850 = vmatpush1.msra.mxu0 %v474
    %851 = vmatprep.subr.mxu0 0.0
    %852 = vmatpush1.msra.mxu0 %v475
    %853 = vmatprep.subr.mxu0 0.0
    %854 = vmatpush1.msra.mxu0 %v476
    %855 = vmatprep.subr.mxu0 0.0
    %856 = vmatpush1.msra.mxu0 %v477
    %857 = vmatprep.subr.mxu0 0.0
    %858 = vmatpush1.msra.mxu0 %v478
    %859 = vmatprep.subr.mxu0 0.0
    %860 = vmatpush1.msra.mxu0 %v479
    %861 = vmatprep.subr.mxu0 0.0
    %862 = vmatpush1.msra.mxu0 %v480
    %863 = vmatprep.subr.mxu0 0.0
    %864 = vmatpush1.msra.mxu0 %v481
    %865 = vmatprep.subr.mxu0 0.0
    %866 = vmatpush1.msra.mxu0 %v482
    %867 = vmatprep.subr.mxu0 0.0
    %868 = vmatpush1.msra.mxu0 %v483
    %869 = vmatprep.subr.mxu0 0.0
    %870 = vmatpush1.msra.mxu0 %v484
    %871 = vmatprep.subr.mxu0 0.0
    %872 = vmatpush1.msra.mxu0 %v485
    %873 = vmatprep.subr.mxu0 0.0
    %874 = vmatpush1.msra.mxu0 %v486
    %875 = vmatprep.subr.mxu0 0.0
    %876 = vmatpush1.msra.mxu0 %v487
    %877 = vmatprep.subr.mxu0 0.0
    %878 = vmatpush1.msra.mxu0 %v488
    %879 = vmatprep.subr.mxu0 0.0
    %880 = vmatpush1.msra.mxu0 %v489
    %881 = vmatprep.subr.mxu0 0.0
    %882 = vmatpush1.msra.mxu0 %v490
    %883 = vmatprep.subr.mxu0 0.0
    %884 = vmatpush1.msra.mxu0 %v491
    %885 = vmatprep.subr.mxu0 0.0
    %886 = vmatpush1.msra.mxu0 %v492
    %887 = vmatprep.subr.mxu0 0.0
    %888 = vmatpush1.msra.mxu0 %v493
    %889 = vmatprep.subr.mxu0 0.0
    %890 = vmatpush1.msra.mxu0 %v494
    %891 = vmatprep.mubr.f32.mxu0 %v30
    %892 = vmatmul.mubr.f32.gmra.mrb[0].mxu0 %v29
    %v893 = vpop.f32.mrb[0].mxu0
    %v894 = vadd.f32 %v819, %v893
    %v895 = vpop.f32.mrb[0].mxu0
    %896 = vmatprep.mubr.f32.mxu0 %v36
    %897 = vmatmul.mubr.f32.gmra.mrb[0].mxu0 %v35
    %v898 = vpop.f32.mrb[0].mxu0
    %v899 = vadd.f32 %v824, %v898
    %v900 = vpop.f32.mrb[0].mxu0
    %901 = vdwg.mxu0
    %902 = vmatprep.subr.mxu0 0.0
    %903 = vmatpush1.msra.mxu0 %v495
    %904 = vmatprep.subr.mxu0 0.0
    %905 = vmatpush1.msra.mxu0 %v496
    %906 = vmatprep.subr.mxu0 0.0
    %907 = vmatpush1.msra.mxu0 %v497
    %908 = vmatprep.subr.mxu0 0.0
    %909 = vmatpush1.msra.mxu0 %v498
    %910 = vmatprep.subr.mxu0 0.0
    %911 = vmatpush1.msra.mxu0 %v499
    %912 = vmatprep.subr.mxu0 0.0
    %913 = vmatpush1.msra.mxu0 %v500
    %914 = vmatprep.subr.mxu0 0.0
    %915 = vmatpush1.msra.mxu0 %v501
    %916 = vmatprep.subr.mxu0 0.0
    %917 = vmatpush1.msra.mxu0 %v502
    %918 = vmatprep.subr.mxu0 0.0
    %919 = vmatpush1.msra.mxu0 %v503
    %920 = vmatprep.subr.mxu0 0.0
    %921 = vmatpush1.msra.mxu0 %v504
    %922 = vmatprep.subr.mxu0 0.0
    %923 = vmatpush1.msra.mxu0 %v505
    %924 = vmatprep.subr.mxu0 0.0
    %925 = vmatpush1.msra.mxu0 %v506
    %926 = vmatprep.subr.mxu0 0.0
    %927 = vmatpush1.msra.mxu0 %v507
    %928 = vmatprep.subr.mxu0 0.0
    %929 = vmatpush1.msra.mxu0 %v508
    %930 = vmatprep.subr.mxu0 0.0
    %931 = vmatpush1.msra.mxu0 %v509
    %932 = vmatprep.subr.mxu0 0.0
    %933 = vmatpush1.msra.mxu0 %v510
    %934 = vmatprep.subr.mxu0 0.0
    %935 = vmatpush1.msra.mxu0 %v511
    %936 = vmatprep.subr.mxu0 0.0
    %937 = vmatpush1.msra.mxu0 %v512
    %938 = vmatprep.subr.mxu0 0.0
    %939 = vmatpush1.msra.mxu0 %v513
    %940 = vmatprep.subr.mxu0 0.0
    %941 = vmatpush1.msra.mxu0 %v514
    %942 = vmatprep.subr.mxu0 0.0
    %943 = vmatpush1.msra.mxu0 %v515
    %944 = vmatprep.subr.mxu0 0.0
    %945 = vmatpush1.msra.mxu0 %v516
    %946 = vmatprep.subr.mxu0 0.0
    %947 = vmatpush1.msra.mxu0 %v517
    %948 = vmatprep.subr.mxu0 0.0
    %949 = vmatpush1.msra.mxu0 %v518
    %950 = vmatprep.subr.mxu0 0.0
    %951 = vmatpush1.msra.mxu0 %v519
    %952 = vmatprep.subr.mxu0 0.0
    %953 = vmatpush1.msra.mxu0 %v520
    %954 = vmatprep.subr.mxu0 0.0
    %955 = vmatpush1.msra.mxu0 %v521
    %956 = vmatprep.subr.mxu0 0.0
    %957 = vmatpush1.msra.mxu0 %v522
    %958 = vmatprep.subr.mxu0 0.0
    %959 = vmatpush1.msra.mxu0 %v523
    %960 = vmatprep.subr.mxu0 0.0
    %961 = vmatpush1.msra.mxu0 %v524
    %962 = vmatprep.subr.mxu0 0.0
    %963 = vmatpush1.msra.mxu0 %v525
    %964 = vmatprep.subr.mxu0 0.0
    %965 = vmatpush1.msra.mxu0 %v526
    %966 = vmatprep.mubr.f32.mxu0 %v32
    %967 = vmatmul.mubr.f32.gmra.mrb[0].mxu0 %v31
    %v968 = vpop.f32.mrb[0].mxu0
    %v969 = vadd.f32 %v894, %v968
    %v970 = vpop.f32.mrb[0].mxu0
    %971 = vmatprep.mubr.f32.mxu0 %v38
    %972 = vmatmul.mubr.f32.gmra.mrb[0].mxu0 %v37
    %v973 = vpop.f32.mrb[0].mxu0
    %v974 = vadd.f32 %v899, %v973
    %v975 = vpop.f32.mrb[0].mxu0
    %976 = vdwg.mxu0
    %v977 = vsel %vm231, %v744, -inf
    %978 = vmax.xlane.f32.xlu0 %v977
    %v979 = vpop.xlane.xlu0 %978
    %v980 = vsel %vm231, %v749, -inf
    %981 = vmax.xlane.f32.xlu0 %v980
    %v982 = vpop.xlane.xlu0 %981
    %v983 = vsub.f32 %v744, %v979
    %v984 = vsub.f32 %v749, %v982
    %v985 = vmul.f32 %v983, 1.442695
    %v986 = vpow.pop %v985
    %v987 = vmul.f32 %v984, 1.442695
    %v988 = vpow.pop %v987
    %v989 = vmul.f32 %v986, %v969
    %v990 = vmul.f32 %v988, %v974
    %v991 = vsel %vm231, %v989, 0.0
    %992 = vadd.xlane.f32.xlu0 %v991
    %v993 = vpop.xlane.xlu0 %992
    %v994 = vsel %vm231, %v990, 0.0
    %995 = vadd.xlane.f32.xlu0 %v994
    %v996 = vpop.xlane.xlu0 %995
    %v997 = vsel %vm231, %v986, 0.0
    %998 = vadd.xlane.f32.xlu0 %v997
    %v999 = vpop.xlane.xlu0 %998
    %v1000 = vsel %vm231, %v988, 0.0
    %1001 = vadd.xlane.f32.xlu0 %v1000
    %v1002 = vpop.xlane.xlu0 %1001
    %v1003 = vrcp.pop %v999
    %v1004 = vrcp.pop %v1002
    %v1005 = vmul.f32 %v993, %v1003
    %v1006 = vmul.f32 %v996, %v1004
    %v1009 = vlaneseq
    %v1010 = vand.u32 %v1009, 127
    %v1011 = vlaneseq
    %v1012 = vshrl.u32 %v1011, 7
    %v1013 = vsub.s32 %v1010, %v1012
    %v1014 = vrot.slane %v1005, %v1013
    %v1015 = vadd.s32 %v1010, 4294967288
    %v1016 = vlaneseq
    %v1017 = vshrl.u32 %v1016, 7
    %v1018 = vsub.s32 %v1015, %v1017
    %v1019 = vrot.slane %v1006, %v1018
    %vm1020 = vcmask 130112
    %v1021 = vsel %vm1020, %v1019, %v1014
    %vm1023 = vcmask 122880
    %1024 = vst.msk [vmem:[#allocation2] sm:$0x1] %vm1023, %v1021
    %s1025 = scalar_lea.vmem %s2, 768
    %v1026 = vld [vmem:[%s1025] sm:$0xff]
    %v1027 = vld [vmem:[%s1025 + $0x8] sm:$0xff]
    %v1028 = vld [vmem:[%s1025 + $0x10] sm:$0xff]
    %v1029 = vld [vmem:[%s1025 + $0x18] sm:$0xff]
    %v1030 = vld [vmem:[%s1025 + $0x20] sm:$0xff]
    %v1031 = vld [vmem:[%s1025 + $0x28] sm:$0xff]
    %v1032 = vld [vmem:[%s1025 + $0x30] sm:$0xff]
    %v1033 = vld [vmem:[%s1025 + $0x38] sm:$0xff]
    %v1034 = vld [vmem:[%s1025 + $0x40] sm:$0xff]
    %v1035 = vld [vmem:[%s1025 + $0x48] sm:$0xff]
    %v1036 = vld [vmem:[%s1025 + $0x50] sm:$0xff]
    %v1037 = vld [vmem:[%s1025 + $0x58] sm:$0xff]
    %v1038 = vld [vmem:[%s1025 + $0x60] sm:$0xff]
    %v1039 = vld [vmem:[%s1025 + $0x68] sm:$0xff]
    %v1040 = vld [vmem:[%s1025 + $0x70] sm:$0xff]
    %v1041 = vld [vmem:[%s1025 + $0x78] sm:$0xff]
    %v1042 = vld [vmem:[%s1025 + $0x80] sm:$0xff]
    %v1043 = vld [vmem:[%s1025 + $0x88] sm:$0xff]
    %v1044 = vld [vmem:[%s1025 + $0x90] sm:$0xff]
    %v1045 = vld [vmem:[%s1025 + $0x98] sm:$0xff]
    %v1046 = vld [vmem:[%s1025 + $0xa0] sm:$0xff]
    %v1047 = vld [vmem:[%s1025 + $0xa8] sm:$0xff]
    %v1048 = vld [vmem:[%s1025 + $0xb0] sm:$0xff]
    %v1049 = vld [vmem:[%s1025 + $0xb8] sm:$0xff]
    %v1050 = vld [vmem:[%s1025 + $0xc0] sm:$0xff]
    %v1051 = vld [vmem:[%s1025 + $0xc8] sm:$0xff]
    %v1052 = vld [vmem:[%s1025 + $0xd0] sm:$0xff]
    %v1053 = vld [vmem:[%s1025 + $0xd8] sm:$0xff]
    %v1054 = vld [vmem:[%s1025 + $0xe0] sm:$0xff]
    %v1055 = vld [vmem:[%s1025 + $0xe8] sm:$0xff]
    %v1056 = vld [vmem:[%s1025 + $0xf0] sm:$0xff]
    %v1057 = vld [vmem:[%s1025 + $0xf8] sm:$0xff]
    %v1058 = vld [vmem:[%s1025 + $0x100] sm:$0xff]
    %v1059 = vld [vmem:[%s1025 + $0x108] sm:$0xff]
    %v1060 = vld [vmem:[%s1025 + $0x110] sm:$0xff]
    %v1061 = vld [vmem:[%s1025 + $0x118] sm:$0xff]
    %v1062 = vld [vmem:[%s1025 + $0x120] sm:$0xff]
    %v1063 = vld [vmem:[%s1025 + $0x128] sm:$0xff]
    %v1064 = vld [vmem:[%s1025 + $0x130] sm:$0xff]
    %v1065 = vld [vmem:[%s1025 + $0x138] sm:$0xff]
    %v1066 = vld [vmem:[%s1025 + $0x140] sm:$0xff]
    %v1067 = vld [vmem:[%s1025 + $0x148] sm:$0xff]
    %v1068 = vld [vmem:[%s1025 + $0x150] sm:$0xff]
    %v1069 = vld [vmem:[%s1025 + $0x158] sm:$0xff]
    %v1070 = vld [vmem:[%s1025 + $0x160] sm:$0xff]
    %v1071 = vld [vmem:[%s1025 + $0x168] sm:$0xff]
    %v1072 = vld [vmem:[%s1025 + $0x170] sm:$0xff]
    %v1073 = vld [vmem:[%s1025 + $0x178] sm:$0xff]
    %v1074 = vld [vmem:[%s1025 + $0x180] sm:$0xff]
    %v1075 = vld [vmem:[%s1025 + $0x188] sm:$0xff]
    %v1076 = vld [vmem:[%s1025 + $0x190] sm:$0xff]
    %v1077 = vld [vmem:[%s1025 + $0x198] sm:$0xff]
    %v1078 = vld [vmem:[%s1025 + $0x1a0] sm:$0xff]
    %v1079 = vld [vmem:[%s1025 + $0x1a8] sm:$0xff]
    %v1080 = vld [vmem:[%s1025 + $0x1b0] sm:$0xff]
    %v1081 = vld [vmem:[%s1025 + $0x1b8] sm:$0xff]
    %v1082 = vld [vmem:[%s1025 + $0x1c0] sm:$0xff]
    %v1083 = vld [vmem:[%s1025 + $0x1c8] sm:$0xff]
    %v1084 = vld [vmem:[%s1025 + $0x1d0] sm:$0xff]
    %v1085 = vld [vmem:[%s1025 + $0x1d8] sm:$0xff]
    %v1086 = vld [vmem:[%s1025 + $0x1e0] sm:$0xff]
    %v1087 = vld [vmem:[%s1025 + $0x1e8] sm:$0xff]
    %v1088 = vld [vmem:[%s1025 + $0x1f0] sm:$0xff]
    %v1089 = vld [vmem:[%s1025 + $0x1f8] sm:$0xff]
    %v1090 = vld [vmem:[%s1025 + $0x200] sm:$0xff]
    %v1091 = vld [vmem:[%s1025 + $0x208] sm:$0xff]
    %v1092 = vld [vmem:[%s1025 + $0x210] sm:$0xff]
    %v1093 = vld [vmem:[%s1025 + $0x218] sm:$0xff]
    %v1094 = vld [vmem:[%s1025 + $0x220] sm:$0xff]
    %v1095 = vld [vmem:[%s1025 + $0x228] sm:$0xff]
    %v1096 = vld [vmem:[%s1025 + $0x230] sm:$0xff]
    %v1097 = vld [vmem:[%s1025 + $0x238] sm:$0xff]
    %v1098 = vld [vmem:[%s1025 + $0x240] sm:$0xff]
    %v1099 = vld [vmem:[%s1025 + $0x248] sm:$0xff]
    %v1100 = vld [vmem:[%s1025 + $0x250] sm:$0xff]
    %v1101 = vld [vmem:[%s1025 + $0x258] sm:$0xff]
    %v1102 = vld [vmem:[%s1025 + $0x260] sm:$0xff]
    %v1103 = vld [vmem:[%s1025 + $0x268] sm:$0xff]
    %v1104 = vld [vmem:[%s1025 + $0x270] sm:$0xff]
    %v1105 = vld [vmem:[%s1025 + $0x278] sm:$0xff]
    %v1106 = vld [vmem:[%s1025 + $0x280] sm:$0xff]
    %v1107 = vld [vmem:[%s1025 + $0x288] sm:$0xff]
    %v1108 = vld [vmem:[%s1025 + $0x290] sm:$0xff]
    %v1109 = vld [vmem:[%s1025 + $0x298] sm:$0xff]
    %v1110 = vld [vmem:[%s1025 + $0x2a0] sm:$0xff]
    %v1111 = vld [vmem:[%s1025 + $0x2a8] sm:$0xff]
    %v1112 = vld [vmem:[%s1025 + $0x2b0] sm:$0xff]
    %v1113 = vld [vmem:[%s1025 + $0x2b8] sm:$0xff]
    %v1114 = vld [vmem:[%s1025 + $0x2c0] sm:$0xff]
    %v1115 = vld [vmem:[%s1025 + $0x2c8] sm:$0xff]
    %v1116 = vld [vmem:[%s1025 + $0x2d0] sm:$0xff]
    %v1117 = vld [vmem:[%s1025 + $0x2d8] sm:$0xff]
    %v1118 = vld [vmem:[%s1025 + $0x2e0] sm:$0xff]
    %v1119 = vld [vmem:[%s1025 + $0x2e8] sm:$0xff]
    %v1120 = vld [vmem:[%s1025 + $0x2f0] sm:$0xff]
    %v1121 = vld [vmem:[%s1025 + $0x2f8] sm:$0xff]
    %v1122 = vmul.f32 %v1026, %v1026
    %v1123 = vmul.f32 %v1027, %v1027
    %v1124 = vmul.f32 %v1028, %v1028
    %v1125 = vmul.f32 %v1029, %v1029
    %v1126 = vmul.f32 %v1030, %v1030
    %v1127 = vmul.f32 %v1031, %v1031
    %v1128 = vmul.f32 %v1032, %v1032
    %v1129 = vmul.f32 %v1033, %v1033
    %v1130 = vmul.f32 %v1034, %v1034
    %v1131 = vmul.f32 %v1035, %v1035
    %v1132 = vmul.f32 %v1036, %v1036
    %v1133 = vmul.f32 %v1037, %v1037
    %v1134 = vmul.f32 %v1038, %v1038
    %v1135 = vmul.f32 %v1039, %v1039
    %v1136 = vmul.f32 %v1040, %v1040
    %v1137 = vmul.f32 %v1041, %v1041
    %v1138 = vmul.f32 %v1042, %v1042
    %v1139 = vmul.f32 %v1043, %v1043
    %v1140 = vmul.f32 %v1044, %v1044
    %v1141 = vmul.f32 %v1045, %v1045
    %v1142 = vmul.f32 %v1046, %v1046
    %v1143 = vmul.f32 %v1047, %v1047
    %v1144 = vmul.f32 %v1048, %v1048
    %v1145 = vmul.f32 %v1049, %v1049
    %v1146 = vmul.f32 %v1050, %v1050
    %v1147 = vmul.f32 %v1051, %v1051
    %v1148 = vmul.f32 %v1052, %v1052
    %v1149 = vmul.f32 %v1053, %v1053
    %v1150 = vmul.f32 %v1054, %v1054
    %v1151 = vmul.f32 %v1055, %v1055
    %v1152 = vmul.f32 %v1056, %v1056
    %v1153 = vmul.f32 %v1057, %v1057
    %v1154 = vmul.f32 %v1058, %v1058
    %v1155 = vmul.f32 %v1059, %v1059
    %v1156 = vmul.f32 %v1060, %v1060
    %v1157 = vmul.f32 %v1061, %v1061
    %v1158 = vmul.f32 %v1062, %v1062
    %v1159 = vmul.f32 %v1063, %v1063
    %v1160 = vmul.f32 %v1064, %v1064
    %v1161 = vmul.f32 %v1065, %v1065
    %v1162 = vmul.f32 %v1066, %v1066
    %v1163 = vmul.f32 %v1067, %v1067
    %v1164 = vmul.f32 %v1068, %v1068
    %v1165 = vmul.f32 %v1069, %v1069
    %v1166 = vmul.f32 %v1070, %v1070
    %v1167 = vmul.f32 %v1071, %v1071
    %v1168 = vmul.f32 %v1072, %v1072
    %v1169 = vmul.f32 %v1073, %v1073
    %v1170 = vmul.f32 %v1074, %v1074
    %v1171 = vmul.f32 %v1075, %v1075
    %v1172 = vmul.f32 %v1076, %v1076
    %v1173 = vmul.f32 %v1077, %v1077
    %v1174 = vmul.f32 %v1078, %v1078
    %v1175 = vmul.f32 %v1079, %v1079
    %v1176 = vmul.f32 %v1080, %v1080
    %v1177 = vmul.f32 %v1081, %v1081
    %v1178 = vmul.f32 %v1082, %v1082
    %v1179 = vmul.f32 %v1083, %v1083
    %v1180 = vmul.f32 %v1084, %v1084
    %v1181 = vmul.f32 %v1085, %v1085
    %v1182 = vmul.f32 %v1086, %v1086
    %v1183 = vmul.f32 %v1087, %v1087
    %v1184 = vmul.f32 %v1088, %v1088
    %v1185 = vmul.f32 %v1089, %v1089
    %v1186 = vmul.f32 %v1090, %v1090
    %v1187 = vmul.f32 %v1091, %v1091
    %v1188 = vmul.f32 %v1092, %v1092
    %v1189 = vmul.f32 %v1093, %v1093
    %v1190 = vmul.f32 %v1094, %v1094
    %v1191 = vmul.f32 %v1095, %v1095
    %v1192 = vmul.f32 %v1096, %v1096
    %v1193 = vmul.f32 %v1097, %v1097
    %v1194 = vmul.f32 %v1098, %v1098
    %v1195 = vmul.f32 %v1099, %v1099
    %v1196 = vmul.f32 %v1100, %v1100
    %v1197 = vmul.f32 %v1101, %v1101
    %v1198 = vmul.f32 %v1102, %v1102
    %v1199 = vmul.f32 %v1103, %v1103
    %v1200 = vmul.f32 %v1104, %v1104
    %v1201 = vmul.f32 %v1105, %v1105
    %v1202 = vmul.f32 %v1106, %v1106
    %v1203 = vmul.f32 %v1107, %v1107
    %v1204 = vmul.f32 %v1108, %v1108
    %v1205 = vmul.f32 %v1109, %v1109
    %v1206 = vmul.f32 %v1110, %v1110
    %v1207 = vmul.f32 %v1111, %v1111
    %v1208 = vmul.f32 %v1112, %v1112
    %v1209 = vmul.f32 %v1113, %v1113
    %v1210 = vmul.f32 %v1114, %v1114
    %v1211 = vmul.f32 %v1115, %v1115
    %v1212 = vmul.f32 %v1116, %v1116
    %v1213 = vmul.f32 %v1117, %v1117
    %v1214 = vmul.f32 %v1118, %v1118
    %v1215 = vmul.f32 %v1119, %v1119
    %v1216 = vmul.f32 %v1120, %v1120
    %v1217 = vmul.f32 %v1121, %v1121
    %v1218 = vsel %vm231, %v1122, 0.0
    %v1219 = vsel %vm231, %v1123, 0.0
    %v1220 = vadd.f32 %v1218, %v1219
    %v1221 = vsel %vm231, %v1124, 0.0
    %v1222 = vadd.f32 %v1220, %v1221
    %v1223 = vsel %vm231, %v1125, 0.0
    %v1224 = vadd.f32 %v1222, %v1223
    %v1225 = vsel %vm231, %v1126, 0.0
    %v1226 = vadd.f32 %v1224, %v1225
    %v1227 = vsel %vm231, %v1127, 0.0
    %v1228 = vadd.f32 %v1226, %v1227
    %v1229 = vsel %vm231, %v1128, 0.0
    %v1230 = vadd.f32 %v1228, %v1229
    %v1231 = vsel %vm231, %v1129, 0.0
    %v1232 = vadd.f32 %v1230, %v1231
    %v1233 = vsel %vm231, %v1130, 0.0
    %v1234 = vadd.f32 %v1232, %v1233
    %v1235 = vsel %vm231, %v1131, 0.0
    %v1236 = vadd.f32 %v1234, %v1235
    %v1237 = vsel %vm231, %v1132, 0.0
    %v1238 = vadd.f32 %v1236, %v1237
    %v1239 = vsel %vm231, %v1133, 0.0
    %v1240 = vadd.f32 %v1238, %v1239
    %v1241 = vsel %vm231, %v1134, 0.0
    %v1242 = vadd.f32 %v1240, %v1241
    %v1243 = vsel %vm231, %v1135, 0.0
    %v1244 = vadd.f32 %v1242, %v1243
    %v1245 = vsel %vm231, %v1136, 0.0
    %v1246 = vadd.f32 %v1244, %v1245
    %v1247 = vsel %vm231, %v1137, 0.0
    %v1248 = vadd.f32 %v1246, %v1247
    %v1249 = vsel %vm231, %v1138, 0.0
    %v1250 = vadd.f32 %v1248, %v1249
    %v1251 = vsel %vm231, %v1139, 0.0
    %v1252 = vadd.f32 %v1250, %v1251
    %v1253 = vsel %vm231, %v1140, 0.0
    %v1254 = vadd.f32 %v1252, %v1253
    %v1255 = vsel %vm231, %v1141, 0.0
    %v1256 = vadd.f32 %v1254, %v1255
    %v1257 = vsel %vm231, %v1142, 0.0
    %v1258 = vadd.f32 %v1256, %v1257
    %v1259 = vsel %vm231, %v1143, 0.0
    %v1260 = vadd.f32 %v1258, %v1259
    %v1261 = vsel %vm231, %v1144, 0.0
    %v1262 = vadd.f32 %v1260, %v1261
    %v1263 = vsel %vm231, %v1145, 0.0
    %v1264 = vadd.f32 %v1262, %v1263
    %v1265 = vsel %vm231, %v1146, 0.0
    %v1266 = vadd.f32 %v1264, %v1265
    %v1267 = vsel %vm231, %v1147, 0.0
    %v1268 = vadd.f32 %v1266, %v1267
    %v1269 = vsel %vm231, %v1148, 0.0
    %v1270 = vadd.f32 %v1268, %v1269
    %v1271 = vsel %vm231, %v1149, 0.0
    %v1272 = vadd.f32 %v1270, %v1271
    %v1273 = vsel %vm231, %v1150, 0.0
    %v1274 = vadd.f32 %v1272, %v1273
    %v1275 = vsel %vm231, %v1151, 0.0
    %v1276 = vadd.f32 %v1274, %v1275
    %v1277 = vsel %vm231, %v1152, 0.0
    %v1278 = vadd.f32 %v1276, %v1277
    %v1279 = vsel %vm231, %v1153, 0.0
    %v1280 = vadd.f32 %v1278, %v1279
    %v1281 = vsel %vm231, %v1154, 0.0
    %v1282 = vadd.f32 %v1280, %v1281
    %v1283 = vsel %vm231, %v1155, 0.0
    %v1284 = vadd.f32 %v1282, %v1283
    %v1285 = vsel %vm231, %v1156, 0.0
    %v1286 = vadd.f32 %v1284, %v1285
    %v1287 = vsel %vm231, %v1157, 0.0
    %v1288 = vadd.f32 %v1286, %v1287
    %v1289 = vsel %vm231, %v1158, 0.0
    %v1290 = vadd.f32 %v1288, %v1289
    %v1291 = vsel %vm231, %v1159, 0.0
    %v1292 = vadd.f32 %v1290, %v1291
    %v1293 = vsel %vm231, %v1160, 0.0
    %v1294 = vadd.f32 %v1292, %v1293
    %v1295 = vsel %vm231, %v1161, 0.0
    %v1296 = vadd.f32 %v1294, %v1295
    %v1297 = vsel %vm231, %v1162, 0.0
    %v1298 = vadd.f32 %v1296, %v1297
    %v1299 = vsel %vm231, %v1163, 0.0
    %v1300 = vadd.f32 %v1298, %v1299
    %v1301 = vsel %vm231, %v1164, 0.0
    %v1302 = vadd.f32 %v1300, %v1301
    %v1303 = vsel %vm231, %v1165, 0.0
    %v1304 = vadd.f32 %v1302, %v1303
    %v1305 = vsel %vm231, %v1166, 0.0
    %v1306 = vadd.f32 %v1304, %v1305
    %v1307 = vsel %vm231, %v1167, 0.0
    %v1308 = vadd.f32 %v1306, %v1307
    %v1309 = vsel %vm231, %v1168, 0.0
    %v1310 = vadd.f32 %v1308, %v1309
    %v1311 = vsel %vm231, %v1169, 0.0
    %v1312 = vadd.f32 %v1310, %v1311
    %v1313 = vsel %vm231, %v1170, 0.0
    %v1314 = vadd.f32 %v1312, %v1313
    %v1315 = vsel %vm231, %v1171, 0.0
    %v1316 = vadd.f32 %v1314, %v1315
    %v1317 = vsel %vm231, %v1172, 0.0
    %v1318 = vadd.f32 %v1316, %v1317
    %v1319 = vsel %vm231, %v1173, 0.0
    %v1320 = vadd.f32 %v1318, %v1319
    %v1321 = vsel %vm231, %v1174, 0.0
    %v1322 = vadd.f32 %v1320, %v1321
    %v1323 = vsel %vm231, %v1175, 0.0
    %v1324 = vadd.f32 %v1322, %v1323
    %v1325 = vsel %vm231, %v1176, 0.0
    %v1326 = vadd.f32 %v1324, %v1325
    %v1327 = vsel %vm231, %v1177, 0.0
    %v1328 = vadd.f32 %v1326, %v1327
    %v1329 = vsel %vm231, %v1178, 0.0
    %v1330 = vadd.f32 %v1328, %v1329
    %v1331 = vsel %vm231, %v1179, 0.0
    %v1332 = vadd.f32 %v1330, %v1331
    %v1333 = vsel %vm231, %v1180, 0.0
    %v1334 = vadd.f32 %v1332, %v1333
    %v1335 = vsel %vm231, %v1181, 0.0
    %v1336 = vadd.f32 %v1334, %v1335
    %v1337 = vsel %vm231, %v1182, 0.0
    %v1338 = vadd.f32 %v1336, %v1337
    %v1339 = vsel %vm231, %v1183, 0.0
    %v1340 = vadd.f32 %v1338, %v1339
    %v1341 = vsel %vm231, %v1184, 0.0
    %v1342 = vadd.f32 %v1340, %v1341
    %v1343 = vsel %vm231, %v1185, 0.0
    %v1344 = vadd.f32 %v1342, %v1343
    %v1345 = vsel %vm231, %v1186, 0.0
    %v1346 = vadd.f32 %v1344, %v1345
    %v1347 = vsel %vm231, %v1187, 0.0
    %v1348 = vadd.f32 %v1346, %v1347
    %v1349 = vsel %vm231, %v1188, 0.0
    %v1350 = vadd.f32 %v1348, %v1349
    %v1351 = vsel %vm231, %v1189, 0.0
    %v1352 = vadd.f32 %v1350, %v1351
    %v1353 = vsel %vm231, %v1190, 0.0
    %v1354 = vadd.f32 %v1352, %v1353
    %v1355 = vsel %vm231, %v1191, 0.0
    %v1356 = vadd.f32 %v1354, %v1355
    %v1357 = vsel %vm231, %v1192, 0.0
    %v1358 = vadd.f32 %v1356, %v1357
    %v1359 = vsel %vm231, %v1193, 0.0
    %v1360 = vadd.f32 %v1358, %v1359
    %v1361 = vsel %vm231, %v1194, 0.0
    %v1362 = vadd.f32 %v1360, %v1361
    %v1363 = vsel %vm231, %v1195, 0.0
    %v1364 = vadd.f32 %v1362, %v1363
    %v1365 = vsel %vm231, %v1196, 0.0
    %v1366 = vadd.f32 %v1364, %v1365
    %v1367 = vsel %vm231, %v1197, 0.0
    %v1368 = vadd.f32 %v1366, %v1367
    %v1369 = vsel %vm231, %v1198, 0.0
    %v1370 = vadd.f32 %v1368, %v1369
    %v1371 = vsel %vm231, %v1199, 0.0
    %v1372 = vadd.f32 %v1370, %v1371
    %v1373 = vsel %vm231, %v1200, 0.0
    %v1374 = vadd.f32 %v1372, %v1373
    %v1375 = vsel %vm231, %v1201, 0.0
    %v1376 = vadd.f32 %v1374, %v1375
    %v1377 = vsel %vm231, %v1202, 0.0
    %v1378 = vadd.f32 %v1376, %v1377
    %v1379 = vsel %vm231, %v1203, 0.0
    %v1380 = vadd.f32 %v1378, %v1379
    %v1381 = vsel %vm231, %v1204, 0.0
    %v1382 = vadd.f32 %v1380, %v1381
    %v1383 = vsel %vm231, %v1205, 0.0
    %v1384 = vadd.f32 %v1382, %v1383
    %v1385 = vsel %vm231, %v1206, 0.0
    %v1386 = vadd.f32 %v1384, %v1385
    %v1387 = vsel %vm231, %v1207, 0.0
    %v1388 = vadd.f32 %v1386, %v1387
    %v1389 = vsel %vm231, %v1208, 0.0
    %v1390 = vadd.f32 %v1388, %v1389
    %v1391 = vsel %vm231, %v1209, 0.0
    %v1392 = vadd.f32 %v1390, %v1391
    %v1393 = vsel %vm231, %v1210, 0.0
    %v1394 = vadd.f32 %v1392, %v1393
    %v1395 = vsel %vm231, %v1211, 0.0
    %v1396 = vadd.f32 %v1394, %v1395
    %v1397 = vsel %vm231, %v1212, 0.0
    %v1398 = vadd.f32 %v1396, %v1397
    %v1399 = vsel %vm231, %v1213, 0.0
    %v1400 = vadd.f32 %v1398, %v1399
    %v1401 = vsel %vm231, %v1214, 0.0
    %v1402 = vadd.f32 %v1400, %v1401
    %v1403 = vsel %vm231, %v1215, 0.0
    %v1404 = vadd.f32 %v1402, %v1403
    %v1405 = vsel %vm231, %v1216, 0.0
    %v1406 = vadd.f32 %v1404, %v1405
    %v1407 = vsel %vm231, %v1217, 0.0
    %v1408 = vadd.f32 %v1406, %v1407
    %v1409 = vrot.slane %v1408, 4
    %v1410 = vadd.f32 %v1408, %v1409
    %v1411 = vrot.slane %v1410, 2
    %v1412 = vadd.f32 %v1410, %v1411
    %v1413 = vrot.slane %v1412, 1
    %v1414 = vadd.f32 %v1412, %v1413
    %v1415 = vmax.f32 %v1414, 1e-24
    %v1416 = vrsqrt.pop %v1415
    %v1417 = vmul.f32 %v1026, %v1416
    %v1418 = vmul.f32 %v1027, %v1416
    %v1419 = vmul.f32 %v1028, %v1416
    %v1420 = vmul.f32 %v1029, %v1416
    %v1421 = vmul.f32 %v1030, %v1416
    %v1422 = vmul.f32 %v1031, %v1416
    %v1423 = vmul.f32 %v1032, %v1416
    %v1424 = vmul.f32 %v1033, %v1416
    %v1425 = vmul.f32 %v1034, %v1416
    %v1426 = vmul.f32 %v1035, %v1416
    %v1427 = vmul.f32 %v1036, %v1416
    %v1428 = vmul.f32 %v1037, %v1416
    %v1429 = vmul.f32 %v1038, %v1416
    %v1430 = vmul.f32 %v1039, %v1416
    %v1431 = vmul.f32 %v1040, %v1416
    %v1432 = vmul.f32 %v1041, %v1416
    %v1433 = vmul.f32 %v1042, %v1416
    %v1434 = vmul.f32 %v1043, %v1416
    %v1435 = vmul.f32 %v1044, %v1416
    %v1436 = vmul.f32 %v1045, %v1416
    %v1437 = vmul.f32 %v1046, %v1416
    %v1438 = vmul.f32 %v1047, %v1416
    %v1439 = vmul.f32 %v1048, %v1416
    %v1440 = vmul.f32 %v1049, %v1416
    %v1441 = vmul.f32 %v1050, %v1416
    %v1442 = vmul.f32 %v1051, %v1416
    %v1443 = vmul.f32 %v1052, %v1416
    %v1444 = vmul.f32 %v1053, %v1416
    %v1445 = vmul.f32 %v1054, %v1416
    %v1446 = vmul.f32 %v1055, %v1416
    %v1447 = vmul.f32 %v1056, %v1416
    %v1448 = vmul.f32 %v1057, %v1416
    %v1449 = vmul.f32 %v1058, %v1416
    %v1450 = vmul.f32 %v1059, %v1416
    %v1451 = vmul.f32 %v1060, %v1416
    %v1452 = vmul.f32 %v1061, %v1416
    %v1453 = vmul.f32 %v1062, %v1416
    %v1454 = vmul.f32 %v1063, %v1416
    %v1455 = vmul.f32 %v1064, %v1416
    %v1456 = vmul.f32 %v1065, %v1416
    %v1457 = vmul.f32 %v1066, %v1416
    %v1458 = vmul.f32 %v1067, %v1416
    %v1459 = vmul.f32 %v1068, %v1416
    %v1460 = vmul.f32 %v1069, %v1416
    %v1461 = vmul.f32 %v1070, %v1416
    %v1462 = vmul.f32 %v1071, %v1416
    %v1463 = vmul.f32 %v1072, %v1416
    %v1464 = vmul.f32 %v1073, %v1416
    %v1465 = vmul.f32 %v1074, %v1416
    %v1466 = vmul.f32 %v1075, %v1416
    %v1467 = vmul.f32 %v1076, %v1416
    %v1468 = vmul.f32 %v1077, %v1416
    %v1469 = vmul.f32 %v1078, %v1416
    %v1470 = vmul.f32 %v1079, %v1416
    %v1471 = vmul.f32 %v1080, %v1416
    %v1472 = vmul.f32 %v1081, %v1416
    %v1473 = vmul.f32 %v1082, %v1416
    %v1474 = vmul.f32 %v1083, %v1416
    %v1475 = vmul.f32 %v1084, %v1416
    %v1476 = vmul.f32 %v1085, %v1416
    %v1477 = vmul.f32 %v1086, %v1416
    %v1478 = vmul.f32 %v1087, %v1416
    %v1479 = vmul.f32 %v1088, %v1416
    %v1480 = vmul.f32 %v1089, %v1416
    %v1481 = vmul.f32 %v1090, %v1416
    %v1482 = vmul.f32 %v1091, %v1416
    %v1483 = vmul.f32 %v1092, %v1416
    %v1484 = vmul.f32 %v1093, %v1416
    %v1485 = vmul.f32 %v1094, %v1416
    %v1486 = vmul.f32 %v1095, %v1416
    %v1487 = vmul.f32 %v1096, %v1416
    %v1488 = vmul.f32 %v1097, %v1416
    %v1489 = vmul.f32 %v1098, %v1416
    %v1490 = vmul.f32 %v1099, %v1416
    %v1491 = vmul.f32 %v1100, %v1416
    %v1492 = vmul.f32 %v1101, %v1416
    %v1493 = vmul.f32 %v1102, %v1416
    %v1494 = vmul.f32 %v1103, %v1416
    %v1495 = vmul.f32 %v1104, %v1416
    %v1496 = vmul.f32 %v1105, %v1416
    %v1497 = vmul.f32 %v1106, %v1416
    %v1498 = vmul.f32 %v1107, %v1416
    %v1499 = vmul.f32 %v1108, %v1416
    %v1500 = vmul.f32 %v1109, %v1416
    %v1501 = vmul.f32 %v1110, %v1416
    %v1502 = vmul.f32 %v1111, %v1416
    %v1503 = vmul.f32 %v1112, %v1416
    %v1504 = vmul.f32 %v1113, %v1416
    %v1505 = vmul.f32 %v1114, %v1416
    %v1506 = vmul.f32 %v1115, %v1416
    %v1507 = vmul.f32 %v1116, %v1416
    %v1508 = vmul.f32 %v1117, %v1416
    %v1509 = vmul.f32 %v1118, %v1416
    %v1510 = vmul.f32 %v1119, %v1416
    %v1511 = vmul.f32 %v1120, %v1416
    %v1512 = vmul.f32 %v1121, %v1416
    %1513 = vmatprep.subr.mxu0 0.0
    %1514 = vmatpush1.msra.mxu0 %v1417
    %1515 = vmatprep.subr.mxu0 0.0
    %1516 = vmatpush1.msra.mxu0 %v1418
    %1517 = vmatprep.subr.mxu0 0.0
    %1518 = vmatpush1.msra.mxu0 %v1419
    %1519 = vmatprep.subr.mxu0 0.0
    %1520 = vmatpush1.msra.mxu0 %v1420
    %1521 = vmatprep.subr.mxu0 0.0
    %1522 = vmatpush1.msra.mxu0 %v1421
    %1523 = vmatprep.subr.mxu0 0.0
    %1524 = vmatpush1.msra.mxu0 %v1422
    %1525 = vmatprep.subr.mxu0 0.0
    %1526 = vmatpush1.msra.mxu0 %v1423
    %1527 = vmatprep.subr.mxu0 0.0
    %1528 = vmatpush1.msra.mxu0 %v1424
    %1529 = vmatprep.subr.mxu0 0.0
    %1530 = vmatpush1.msra.mxu0 %v1425
    %1531 = vmatprep.subr.mxu0 0.0
    %1532 = vmatpush1.msra.mxu0 %v1426
    %1533 = vmatprep.subr.mxu0 0.0
    %1534 = vmatpush1.msra.mxu0 %v1427
    %1535 = vmatprep.subr.mxu0 0.0
    %1536 = vmatpush1.msra.mxu0 %v1428
    %1537 = vmatprep.subr.mxu0 0.0
    %1538 = vmatpush1.msra.mxu0 %v1429
    %1539 = vmatprep.subr.mxu0 0.0
    %1540 = vmatpush1.msra.mxu0 %v1430
    %1541 = vmatprep.subr.mxu0 0.0
    %1542 = vmatpush1.msra.mxu0 %v1431
    %1543 = vmatprep.subr.mxu0 0.0
    %1544 = vmatpush1.msra.mxu0 %v1432
    %1545 = vmatprep.subr.mxu0 0.0
    %1546 = vmatpush1.msra.mxu0 %v1433
    %1547 = vmatprep.subr.mxu0 0.0
    %1548 = vmatpush1.msra.mxu0 %v1434
    %1549 = vmatprep.subr.mxu0 0.0
    %1550 = vmatpush1.msra.mxu0 %v1435
    %1551 = vmatprep.subr.mxu0 0.0
    %1552 = vmatpush1.msra.mxu0 %v1436
    %1553 = vmatprep.subr.mxu0 0.0
    %1554 = vmatpush1.msra.mxu0 %v1437
    %1555 = vmatprep.subr.mxu0 0.0
    %1556 = vmatpush1.msra.mxu0 %v1438
    %1557 = vmatprep.subr.mxu0 0.0
    %1558 = vmatpush1.msra.mxu0 %v1439
    %1559 = vmatprep.subr.mxu0 0.0
    %1560 = vmatpush1.msra.mxu0 %v1440
    %1561 = vmatprep.subr.mxu0 0.0
    %1562 = vmatpush1.msra.mxu0 %v1441
    %1563 = vmatprep.subr.mxu0 0.0
    %1564 = vmatpush1.msra.mxu0 %v1442
    %1565 = vmatprep.subr.mxu0 0.0
    %1566 = vmatpush1.msra.mxu0 %v1443
    %1567 = vmatprep.subr.mxu0 0.0
    %1568 = vmatpush1.msra.mxu0 %v1444
    %1569 = vmatprep.subr.mxu0 0.0
    %1570 = vmatpush1.msra.mxu0 %v1445
    %1571 = vmatprep.subr.mxu0 0.0
    %1572 = vmatpush1.msra.mxu0 %v1446
    %1573 = vmatprep.subr.mxu0 0.0
    %1574 = vmatpush1.msra.mxu0 %v1447
    %1575 = vmatprep.subr.mxu0 0.0
    %1576 = vmatpush1.msra.mxu0 %v1448
    %1577 = vmatprep.mubr.f32.mxu0 %v16
    %1578 = vmatmul.mubr.f32.gmra.mrb[0].mxu0 %v15
    %v1579 = vpop.f32.mrb[0].mxu0
    %v1580 = vadd.f32 0.0, %v1579
    %v1581 = vpop.f32.mrb[0].mxu0
    %1582 = vmatprep.mubr.f32.mxu0 %v22
    %1583 = vmatmul.mubr.f32.gmra.mrb[0].mxu0 %v21
    %v1584 = vpop.f32.mrb[0].mxu0
    %v1585 = vadd.f32 0.0, %v1584
    %v1586 = vpop.f32.mrb[0].mxu0
    %1587 = vdwg.mxu0
    %1588 = vmatprep.subr.mxu0 0.0
    %1589 = vmatpush1.msra.mxu0 %v1449
    %1590 = vmatprep.subr.mxu0 0.0
    %1591 = vmatpush1.msra.mxu0 %v1450
    %1592 = vmatprep.subr.mxu0 0.0
    %1593 = vmatpush1.msra.mxu0 %v1451
    %1594 = vmatprep.subr.mxu0 0.0
    %1595 = vmatpush1.msra.mxu0 %v1452
    %1596 = vmatprep.subr.mxu0 0.0
    %1597 = vmatpush1.msra.mxu0 %v1453
    %1598 = vmatprep.subr.mxu0 0.0
    %1599 = vmatpush1.msra.mxu0 %v1454
    %1600 = vmatprep.subr.mxu0 0.0
    %1601 = vmatpush1.msra.mxu0 %v1455
    %1602 = vmatprep.subr.mxu0 0.0
    %1603 = vmatpush1.msra.mxu0 %v1456
    %1604 = vmatprep.subr.mxu0 0.0
    %1605 = vmatpush1.msra.mxu0 %v1457
    %1606 = vmatprep.subr.mxu0 0.0
    %1607 = vmatpush1.msra.mxu0 %v1458
    %1608 = vmatprep.subr.mxu0 0.0
    %1609 = vmatpush1.msra.mxu0 %v1459
    %1610 = vmatprep.subr.mxu0 0.0
    %1611 = vmatpush1.msra.mxu0 %v1460
    %1612 = vmatprep.subr.mxu0 0.0
    %1613 = vmatpush1.msra.mxu0 %v1461
    %1614 = vmatprep.subr.mxu0 0.0
    %1615 = vmatpush1.msra.mxu0 %v1462
    %1616 = vmatprep.subr.mxu0 0.0
    %1617 = vmatpush1.msra.mxu0 %v1463
    %1618 = vmatprep.subr.mxu0 0.0
    %1619 = vmatpush1.msra.mxu0 %v1464
    %1620 = vmatprep.subr.mxu0 0.0
    %1621 = vmatpush1.msra.mxu0 %v1465
    %1622 = vmatprep.subr.mxu0 0.0
    %1623 = vmatpush1.msra.mxu0 %v1466
    %1624 = vmatprep.subr.mxu0 0.0
    %1625 = vmatpush1.msra.mxu0 %v1467
    %1626 = vmatprep.subr.mxu0 0.0
    %1627 = vmatpush1.msra.mxu0 %v1468
    %1628 = vmatprep.subr.mxu0 0.0
    %1629 = vmatpush1.msra.mxu0 %v1469
    %1630 = vmatprep.subr.mxu0 0.0
    %1631 = vmatpush1.msra.mxu0 %v1470
    %1632 = vmatprep.subr.mxu0 0.0
    %1633 = vmatpush1.msra.mxu0 %v1471
    %1634 = vmatprep.subr.mxu0 0.0
    %1635 = vmatpush1.msra.mxu0 %v1472
    %1636 = vmatprep.subr.mxu0 0.0
    %1637 = vmatpush1.msra.mxu0 %v1473
    %1638 = vmatprep.subr.mxu0 0.0
    %1639 = vmatpush1.msra.mxu0 %v1474
    %1640 = vmatprep.subr.mxu0 0.0
    %1641 = vmatpush1.msra.mxu0 %v1475
    %1642 = vmatprep.subr.mxu0 0.0
    %1643 = vmatpush1.msra.mxu0 %v1476
    %1644 = vmatprep.subr.mxu0 0.0
    %1645 = vmatpush1.msra.mxu0 %v1477
    %1646 = vmatprep.subr.mxu0 0.0
    %1647 = vmatpush1.msra.mxu0 %v1478
    %1648 = vmatprep.subr.mxu0 0.0
    %1649 = vmatpush1.msra.mxu0 %v1479
    %1650 = vmatprep.subr.mxu0 0.0
    %1651 = vmatpush1.msra.mxu0 %v1480
    %1652 = vmatprep.mubr.f32.mxu0 %v18
    %1653 = vmatmul.mubr.f32.gmra.mrb[0].mxu0 %v17
    %v1654 = vpop.f32.mrb[0].mxu0
    %v1655 = vadd.f32 %v1580, %v1654
    %v1656 = vpop.f32.mrb[0].mxu0
    %1657 = vmatprep.mubr.f32.mxu0 %v24
    %1658 = vmatmul.mubr.f32.gmra.mrb[0].mxu0 %v23
    %v1659 = vpop.f32.mrb[0].mxu0
    %v1660 = vadd.f32 %v1585, %v1659
    %v1661 = vpop.f32.mrb[0].mxu0
    %1662 = vdwg.mxu0
    %1663 = vmatprep.subr.mxu0 0.0
    %1664 = vmatpush1.msra.mxu0 %v1481
    %1665 = vmatprep.subr.mxu0 0.0
    %1666 = vmatpush1.msra.mxu0 %v1482
    %1667 = vmatprep.subr.mxu0 0.0
    %1668 = vmatpush1.msra.mxu0 %v1483
    %1669 = vmatprep.subr.mxu0 0.0
    %1670 = vmatpush1.msra.mxu0 %v1484
    %1671 = vmatprep.subr.mxu0 0.0
    %1672 = vmatpush1.msra.mxu0 %v1485
    %1673 = vmatprep.subr.mxu0 0.0
    %1674 = vmatpush1.msra.mxu0 %v1486
    %1675 = vmatprep.subr.mxu0 0.0
    %1676 = vmatpush1.msra.mxu0 %v1487
    %1677 = vmatprep.subr.mxu0 0.0
    %1678 = vmatpush1.msra.mxu0 %v1488
    %1679 = vmatprep.subr.mxu0 0.0
    %1680 = vmatpush1.msra.mxu0 %v1489
    %1681 = vmatprep.subr.mxu0 0.0
    %1682 = vmatpush1.msra.mxu0 %v1490
    %1683 = vmatprep.subr.mxu0 0.0
    %1684 = vmatpush1.msra.mxu0 %v1491
    %1685 = vmatprep.subr.mxu0 0.0
    %1686 = vmatpush1.msra.mxu0 %v1492
    %1687 = vmatprep.subr.mxu0 0.0
    %1688 = vmatpush1.msra.mxu0 %v1493
    %1689 = vmatprep.subr.mxu0 0.0
    %1690 = vmatpush1.msra.mxu0 %v1494
    %1691 = vmatprep.subr.mxu0 0.0
    %1692 = vmatpush1.msra.mxu0 %v1495
    %1693 = vmatprep.subr.mxu0 0.0
    %1694 = vmatpush1.msra.mxu0 %v1496
    %1695 = vmatprep.subr.mxu0 0.0
    %1696 = vmatpush1.msra.mxu0 %v1497
    %1697 = vmatprep.subr.mxu0 0.0
    %1698 = vmatpush1.msra.mxu0 %v1498
    %1699 = vmatprep.subr.mxu0 0.0
    %1700 = vmatpush1.msra.mxu0 %v1499
    %1701 = vmatprep.subr.mxu0 0.0
    %1702 = vmatpush1.msra.mxu0 %v1500
    %1703 = vmatprep.subr.mxu0 0.0
    %1704 = vmatpush1.msra.mxu0 %v1501
    %1705 = vmatprep.subr.mxu0 0.0
    %1706 = vmatpush1.msra.mxu0 %v1502
    %1707 = vmatprep.subr.mxu0 0.0
    %1708 = vmatpush1.msra.mxu0 %v1503
    %1709 = vmatprep.subr.mxu0 0.0
    %1710 = vmatpush1.msra.mxu0 %v1504
    %1711 = vmatprep.subr.mxu0 0.0
    %1712 = vmatpush1.msra.mxu0 %v1505
    %1713 = vmatprep.subr.mxu0 0.0
    %1714 = vmatpush1.msra.mxu0 %v1506
    %1715 = vmatprep.subr.mxu0 0.0
    %1716 = vmatpush1.msra.mxu0 %v1507
    %1717 = vmatprep.subr.mxu0 0.0
    %1718 = vmatpush1.msra.mxu0 %v1508
    %1719 = vmatprep.subr.mxu0 0.0
    %1720 = vmatpush1.msra.mxu0 %v1509
    %1721 = vmatprep.subr.mxu0 0.0
    %1722 = vmatpush1.msra.mxu0 %v1510
    %1723 = vmatprep.subr.mxu0 0.0
    %1724 = vmatpush1.msra.mxu0 %v1511
    %1725 = vmatprep.subr.mxu0 0.0
    %1726 = vmatpush1.msra.mxu0 %v1512
    %1727 = vmatprep.mubr.f32.mxu0 %v20
    %1728 = vmatmul.mubr.f32.gmra.mrb[0].mxu0 %v19
    %v1729 = vpop.f32.mrb[0].mxu0
    %v1730 = vadd.f32 %v1655, %v1729
    %v1731 = vpop.f32.mrb[0].mxu0
    %1732 = vmatprep.mubr.f32.mxu0 %v26
    %1733 = vmatmul.mubr.f32.gmra.mrb[0].mxu0 %v25
    %v1734 = vpop.f32.mrb[0].mxu0
    %v1735 = vadd.f32 %v1660, %v1734
    %v1736 = vpop.f32.mrb[0].mxu0
    %1737 = vdwg.mxu0
    %1738 = vmatprep.subr.mxu0 0.0
    %1739 = vmatpush1.msra.mxu0 %v1417
    %1740 = vmatprep.subr.mxu0 0.0
    %1741 = vmatpush1.msra.mxu0 %v1418
    %1742 = vmatprep.subr.mxu0 0.0
    %1743 = vmatpush1.msra.mxu0 %v1419
    %1744 = vmatprep.subr.mxu0 0.0
    %1745 = vmatpush1.msra.mxu0 %v1420
    %1746 = vmatprep.subr.mxu0 0.0
    %1747 = vmatpush1.msra.mxu0 %v1421
    %1748 = vmatprep.subr.mxu0 0.0
    %1749 = vmatpush1.msra.mxu0 %v1422
    %1750 = vmatprep.subr.mxu0 0.0
    %1751 = vmatpush1.msra.mxu0 %v1423
    %1752 = vmatprep.subr.mxu0 0.0
    %1753 = vmatpush1.msra.mxu0 %v1424
    %1754 = vmatprep.subr.mxu0 0.0
    %1755 = vmatpush1.msra.mxu0 %v1425
    %1756 = vmatprep.subr.mxu0 0.0
    %1757 = vmatpush1.msra.mxu0 %v1426
    %1758 = vmatprep.subr.mxu0 0.0
    %1759 = vmatpush1.msra.mxu0 %v1427
    %1760 = vmatprep.subr.mxu0 0.0
    %1761 = vmatpush1.msra.mxu0 %v1428
    %1762 = vmatprep.subr.mxu0 0.0
    %1763 = vmatpush1.msra.mxu0 %v1429
    %1764 = vmatprep.subr.mxu0 0.0
    %1765 = vmatpush1.msra.mxu0 %v1430
    %1766 = vmatprep.subr.mxu0 0.0
    %1767 = vmatpush1.msra.mxu0 %v1431
    %1768 = vmatprep.subr.mxu0 0.0
    %1769 = vmatpush1.msra.mxu0 %v1432
    %1770 = vmatprep.subr.mxu0 0.0
    %1771 = vmatpush1.msra.mxu0 %v1433
    %1772 = vmatprep.subr.mxu0 0.0
    %1773 = vmatpush1.msra.mxu0 %v1434
    %1774 = vmatprep.subr.mxu0 0.0
    %1775 = vmatpush1.msra.mxu0 %v1435
    %1776 = vmatprep.subr.mxu0 0.0
    %1777 = vmatpush1.msra.mxu0 %v1436
    %1778 = vmatprep.subr.mxu0 0.0
    %1779 = vmatpush1.msra.mxu0 %v1437
    %1780 = vmatprep.subr.mxu0 0.0
    %1781 = vmatpush1.msra.mxu0 %v1438
    %1782 = vmatprep.subr.mxu0 0.0
    %1783 = vmatpush1.msra.mxu0 %v1439
    %1784 = vmatprep.subr.mxu0 0.0
    %1785 = vmatpush1.msra.mxu0 %v1440
    %1786 = vmatprep.subr.mxu0 0.0
    %1787 = vmatpush1.msra.mxu0 %v1441
    %1788 = vmatprep.subr.mxu0 0.0
    %1789 = vmatpush1.msra.mxu0 %v1442
    %1790 = vmatprep.subr.mxu0 0.0
    %1791 = vmatpush1.msra.mxu0 %v1443
    %1792 = vmatprep.subr.mxu0 0.0
    %1793 = vmatpush1.msra.mxu0 %v1444
    %1794 = vmatprep.subr.mxu0 0.0
    %1795 = vmatpush1.msra.mxu0 %v1445
    %1796 = vmatprep.subr.mxu0 0.0
    %1797 = vmatpush1.msra.mxu0 %v1446
    %1798 = vmatprep.subr.mxu0 0.0
    %1799 = vmatpush1.msra.mxu0 %v1447
    %1800 = vmatprep.subr.mxu0 0.0
    %1801 = vmatpush1.msra.mxu0 %v1448
    %1802 = vmatprep.mubr.f32.mxu0 %v28
    %1803 = vmatmul.mubr.f32.gmra.mrb[0].mxu0 %v27
    %v1804 = vpop.f32.mrb[0].mxu0
    %v1805 = vadd.f32 0.0, %v1804
    %v1806 = vpop.f32.mrb[0].mxu0
    %1807 = vmatprep.mubr.f32.mxu0 %v34
    %1808 = vmatmul.mubr.f32.gmra.mrb[0].mxu0 %v33
    %v1809 = vpop.f32.mrb[0].mxu0
    %v1810 = vadd.f32 0.0, %v1809
    %v1811 = vpop.f32.mrb[0].mxu0
    %1812 = vdwg.mxu0
    %1813 = vmatprep.subr.mxu0 0.0
    %1814 = vmatpush1.msra.mxu0 %v1449
    %1815 = vmatprep.subr.mxu0 0.0
    %1816 = vmatpush1.msra.mxu0 %v1450
    %1817 = vmatprep.subr.mxu0 0.0
    %1818 = vmatpush1.msra.mxu0 %v1451
    %1819 = vmatprep.subr.mxu0 0.0
    %1820 = vmatpush1.msra.mxu0 %v1452
    %1821 = vmatprep.subr.mxu0 0.0
    %1822 = vmatpush1.msra.mxu0 %v1453
    %1823 = vmatprep.subr.mxu0 0.0
    %1824 = vmatpush1.msra.mxu0 %v1454
    %1825 = vmatprep.subr.mxu0 0.0
    %1826 = vmatpush1.msra.mxu0 %v1455
    %1827 = vmatprep.subr.mxu0 0.0
    %1828 = vmatpush1.msra.mxu0 %v1456
    %1829 = vmatprep.subr.mxu0 0.0
    %1830 = vmatpush1.msra.mxu0 %v1457
    %1831 = vmatprep.subr.mxu0 0.0
    %1832 = vmatpush1.msra.mxu0 %v1458
    %1833 = vmatprep.subr.mxu0 0.0
    %1834 = vmatpush1.msra.mxu0 %v1459
    %1835 = vmatprep.subr.mxu0 0.0
    %1836 = vmatpush1.msra.mxu0 %v1460
    %1837 = vmatprep.subr.mxu0 0.0
    %1838 = vmatpush1.msra.mxu0 %v1461
    %1839 = vmatprep.subr.mxu0 0.0
    %1840 = vmatpush1.msra.mxu0 %v1462
    %1841 = vmatprep.subr.mxu0 0.0
    %1842 = vmatpush1.msra.mxu0 %v1463
    %1843 = vmatprep.subr.mxu0 0.0
    %1844 = vmatpush1.msra.mxu0 %v1464
    %1845 = vmatprep.subr.mxu0 0.0
    %1846 = vmatpush1.msra.mxu0 %v1465
    %1847 = vmatprep.subr.mxu0 0.0
    %1848 = vmatpush1.msra.mxu0 %v1466
    %1849 = vmatprep.subr.mxu0 0.0
    %1850 = vmatpush1.msra.mxu0 %v1467
    %1851 = vmatprep.subr.mxu0 0.0
    %1852 = vmatpush1.msra.mxu0 %v1468
    %1853 = vmatprep.subr.mxu0 0.0
    %1854 = vmatpush1.msra.mxu0 %v1469
    %1855 = vmatprep.subr.mxu0 0.0
    %1856 = vmatpush1.msra.mxu0 %v1470
    %1857 = vmatprep.subr.mxu0 0.0
    %1858 = vmatpush1.msra.mxu0 %v1471
    %1859 = vmatprep.subr.mxu0 0.0
    %1860 = vmatpush1.msra.mxu0 %v1472
    %1861 = vmatprep.subr.mxu0 0.0
    %1862 = vmatpush1.msra.mxu0 %v1473
    %1863 = vmatprep.subr.mxu0 0.0
    %1864 = vmatpush1.msra.mxu0 %v1474
    %1865 = vmatprep.subr.mxu0 0.0
    %1866 = vmatpush1.msra.mxu0 %v1475
    %1867 = vmatprep.subr.mxu0 0.0
    %1868 = vmatpush1.msra.mxu0 %v1476
    %1869 = vmatprep.subr.mxu0 0.0
    %1870 = vmatpush1.msra.mxu0 %v1477
    %1871 = vmatprep.subr.mxu0 0.0
    %1872 = vmatpush1.msra.mxu0 %v1478
    %1873 = vmatprep.subr.mxu0 0.0
    %1874 = vmatpush1.msra.mxu0 %v1479
    %1875 = vmatprep.subr.mxu0 0.0
    %1876 = vmatpush1.msra.mxu0 %v1480
    %1877 = vmatprep.mubr.f32.mxu0 %v30
    %1878 = vmatmul.mubr.f32.gmra.mrb[0].mxu0 %v29
    %v1879 = vpop.f32.mrb[0].mxu0
    %v1880 = vadd.f32 %v1805, %v1879
    %v1881 = vpop.f32.mrb[0].mxu0
    %1882 = vmatprep.mubr.f32.mxu0 %v36
    %1883 = vmatmul.mubr.f32.gmra.mrb[0].mxu0 %v35
    %v1884 = vpop.f32.mrb[0].mxu0
    %v1885 = vadd.f32 %v1810, %v1884
    %v1886 = vpop.f32.mrb[0].mxu0
    %1887 = vdwg.mxu0
    %1888 = vmatprep.subr.mxu0 0.0
    %1889 = vmatpush1.msra.mxu0 %v1481
    %1890 = vmatprep.subr.mxu0 0.0
    %1891 = vmatpush1.msra.mxu0 %v1482
    %1892 = vmatprep.subr.mxu0 0.0
    %1893 = vmatpush1.msra.mxu0 %v1483
    %1894 = vmatprep.subr.mxu0 0.0
    %1895 = vmatpush1.msra.mxu0 %v1484
    %1896 = vmatprep.subr.mxu0 0.0
    %1897 = vmatpush1.msra.mxu0 %v1485
    %1898 = vmatprep.subr.mxu0 0.0
    %1899 = vmatpush1.msra.mxu0 %v1486
    %1900 = vmatprep.subr.mxu0 0.0
    %1901 = vmatpush1.msra.mxu0 %v1487
    %1902 = vmatprep.subr.mxu0 0.0
    %1903 = vmatpush1.msra.mxu0 %v1488
    %1904 = vmatprep.subr.mxu0 0.0
    %1905 = vmatpush1.msra.mxu0 %v1489
    %1906 = vmatprep.subr.mxu0 0.0
    %1907 = vmatpush1.msra.mxu0 %v1490
    %1908 = vmatprep.subr.mxu0 0.0
    %1909 = vmatpush1.msra.mxu0 %v1491
    %1910 = vmatprep.subr.mxu0 0.0
    %1911 = vmatpush1.msra.mxu0 %v1492
    %1912 = vmatprep.subr.mxu0 0.0
    %1913 = vmatpush1.msra.mxu0 %v1493
    %1914 = vmatprep.subr.mxu0 0.0
    %1915 = vmatpush1.msra.mxu0 %v1494
    %1916 = vmatprep.subr.mxu0 0.0
    %1917 = vmatpush1.msra.mxu0 %v1495
    %1918 = vmatprep.subr.mxu0 0.0
    %1919 = vmatpush1.msra.mxu0 %v1496
    %1920 = vmatprep.subr.mxu0 0.0
    %1921 = vmatpush1.msra.mxu0 %v1497
    %1922 = vmatprep.subr.mxu0 0.0
    %1923 = vmatpush1.msra.mxu0 %v1498
    %1924 = vmatprep.subr.mxu0 0.0
    %1925 = vmatpush1.msra.mxu0 %v1499
    %1926 = vmatprep.subr.mxu0 0.0
    %1927 = vmatpush1.msra.mxu0 %v1500
    %1928 = vmatprep.subr.mxu0 0.0
    %1929 = vmatpush1.msra.mxu0 %v1501
    %1930 = vmatprep.subr.mxu0 0.0
    %1931 = vmatpush1.msra.mxu0 %v1502
    %1932 = vmatprep.subr.mxu0 0.0
    %1933 = vmatpush1.msra.mxu0 %v1503
    %1934 = vmatprep.subr.mxu0 0.0
    %1935 = vmatpush1.msra.mxu0 %v1504
    %1936 = vmatprep.subr.mxu0 0.0
    %1937 = vmatpush1.msra.mxu0 %v1505
    %1938 = vmatprep.subr.mxu0 0.0
    %1939 = vmatpush1.msra.mxu0 %v1506
    %1940 = vmatprep.subr.mxu0 0.0
    %1941 = vmatpush1.msra.mxu0 %v1507
    %1942 = vmatprep.subr.mxu0 0.0
    %1943 = vmatpush1.msra.mxu0 %v1508
    %1944 = vmatprep.subr.mxu0 0.0
    %1945 = vmatpush1.msra.mxu0 %v1509
    %1946 = vmatprep.subr.mxu0 0.0
    %1947 = vmatpush1.msra.mxu0 %v1510
    %1948 = vmatprep.subr.mxu0 0.0
    %1949 = vmatpush1.msra.mxu0 %v1511
    %1950 = vmatprep.subr.mxu0 0.0
    %1951 = vmatpush1.msra.mxu0 %v1512
    %1952 = vmatprep.mubr.f32.mxu0 %v32
    %1953 = vmatmul.mubr.f32.gmra.mrb[0].mxu0 %v31
    %v1954 = vpop.f32.mrb[0].mxu0
    %v1955 = vadd.f32 %v1880, %v1954
    %v1956 = vpop.f32.mrb[0].mxu0
    %1957 = vmatprep.mubr.f32.mxu0 %v38
    %1958 = vmatmul.mubr.f32.gmra.mrb[0].mxu0 %v37
    %v1959 = vpop.f32.mrb[0].mxu0
    %v1960 = vadd.f32 %v1885, %v1959
    %v1961 = vpop.f32.mrb[0].mxu0
    %1962 = vdwg.mxu0
    %v1963 = vsel %vm231, %v1730, -inf
    %1964 = vmax.xlane.f32.xlu0 %v1963
    %v1965 = vpop.xlane.xlu0 %1964
    %v1966 = vsel %vm231, %v1735, -inf
    %1967 = vmax.xlane.f32.xlu0 %v1966
    %v1968 = vpop.xlane.xlu0 %1967
    %v1969 = vsub.f32 %v1730, %v1965
    %v1970 = vsub.f32 %v1735, %v1968
    %v1971 = vmul.f32 %v1969, 1.442695
    %v1972 = vpow.pop %v1971
    %v1973 = vmul.f32 %v1970, 1.442695
    %v1974 = vpow.pop %v1973
    %v1975 = vmul.f32 %v1972, %v1955
    %v1976 = vmul.f32 %v1974, %v1960
    %v1977 = vsel %vm231, %v1975, 0.0
    %1978 = vadd.xlane.f32.xlu0 %v1977
    %v1979 = vpop.xlane.xlu0 %1978
    %v1980 = vsel %vm231, %v1976, 0.0
    %1981 = vadd.xlane.f32.xlu0 %v1980
    %v1982 = vpop.xlane.xlu0 %1981
    %v1983 = vsel %vm231, %v1972, 0.0
    %1984 = vadd.xlane.f32.xlu0 %v1983
    %v1985 = vpop.xlane.xlu0 %1984
    %v1986 = vsel %vm231, %v1974, 0.0
    %1987 = vadd.xlane.f32.xlu0 %v1986
    %v1988 = vpop.xlane.xlu0 %1987
    %v1989 = vrcp.pop %v1985
    %v1990 = vrcp.pop %v1988
    %v1991 = vmul.f32 %v1979, %v1989
    %v1992 = vmul.f32 %v1982, %v1990
    %v1995 = vlaneseq
    %v1996 = vshrl.u32 %v1995, 7
    %v1997 = vsub.s32 %v1010, %v1996
    %v1998 = vrot.slane %v1991, %v1997
    %v1999 = vlaneseq
    %v2000 = vshrl.u32 %v1999, 7
    %v2001 = vsub.s32 %v1015, %v2000
    %v2002 = vrot.slane %v1992, %v2001
    %v2003 = vsel %vm1020, %v2002, %v1998
    %2005 = vst.msk [vmem:[#allocation2 + $0x1] sm:$0x1] %vm1023, %v2003
    // Predicated region
    $region14: #{tpu_custom_call.1} parent=1 // pred_check
      _
    $region15: #{tpu_custom_call.1} parent=1 // pred_check_branch
      %2007 = sbr.rel (0) target = $region17
    $region16: #{tpu_custom_call.1} parent=1 // pred_region
      %s2009 = ssub.s32 32, 32
      %2010 = vsyncadd [#allocation3], %s2009
      %s2012 = sshll.u32 [#allocation2], 4
      %s2013 = int_to_ptr.vmem [resolvable:$true] %s2012
      %2015 = dma.vmem_to_hbm [thread:$0]  %s2013, 32, %s3, [#allocation3]
    $region17: #{tpu_custom_call.1} parent=1 // pred_fallthru
      _
    // Predicated region
    $region18: #{tpu_custom_call.1} parent=1 // pred_check
      _
    $region19: #{tpu_custom_call.1} parent=1 // pred_check_branch
      %2017 = sbr.rel (0) target = $region21
    $region20: #{tpu_custom_call.1} parent=1 // pred_region
      %2018 = dma.done [#allocation3], 32
    $region21: #{tpu_custom_call.1} parent=1 // pred_fallthru
      _
    %2019 = vsyncpa [#allocation3], 1

</llo_original>
